<compile_context>
chip_gen: v5e
topology: v5e:2x2
jax: 0.10.0
libtpu: 0.0.40
codegen_flags: <defaults>
</compile_context>

<pallas_src>
import functools

import jax
import jax.numpy as jnp
from jax import lax
from jax.experimental import pallas as pl
from jax.experimental.pallas import tpu as pltpu


_GUARD = 128  # lane guard band of the conv2 scratch slab (multiple of 128)


def _bottleneck_kernel(x_main_ref, x_top_ref, x_bot_ref, w1_ref, w2_ref,
                       w3_ref, bi_ref, bo_ref, o_ref, slab_ref):
    """One (image n, row-tile j) grid step.

    Block shapes (channels-first, spatial flattened so lanes are dense):
      x_main_ref : (1, C, tile_h*W)  rows [j*tile_h, (j+1)*tile_h) of x
      x_top_ref  : (1, C, W)         row max(j*tile_h - 1, 0) of x
      x_bot_ref  : (1, C, W)         row min((j+1)*tile_h, H-1) of x
      w1_ref     : (Ci, C)           1x1 conv, BN1 scale folded in
      w2_ref     : (3, Ci, 3*Ci)     3x3 conv, [ky, out, kx*Ci + in], BN2 folded
      w3_ref     : (C, Ci)           1x1 conv, BN3 scale folded in
      bi_ref     : (Ci, 2)           columns: b1, b2 (folded BN shifts)
      bo_ref     : (C, 1)            column:  b3
      o_ref      : (1, C, tile_h*W)
      slab_ref   : VMEM (3*Ci, (tile_h+2)*W + 2*_GUARD) f32 scratch.
                   Row blocks hold the dx = -1 / 0 / +1 operands of conv2.
    """
    f32 = jnp.float32
    j = pl.program_id(1)
    n_h = pl.num_programs(1)

    thw = o_ref.shape[2]                 # tile_h * W
    im_w = x_top_ref.shape[2]            # W
    ci = w1_ref.shape[0]
    p_lanes = thw + 2 * im_w             # (tile_h + 2) * W
    g = (slab_ref.shape[1] - p_lanes) // 2   # == _GUARD

    b1 = bi_ref[:, 0:1]
    b2 = bi_ref[:, 1:2]
    b3 = bo_ref[:, 0:1]

    x_main = x_main_ref[0].astype(f32)                       # (C, thw)

    # ---- ext_conv1: 1x1 conv (BN scale folded) + bias + ReLU on the tile
    #      body and on the two halo rows. --------------------------------
    w1 = w1_ref[...]
    h1_mid = jnp.maximum(
        jnp.dot(w1, x_main, preferred_element_type=f32) + b1, 0.0)
    h1_top = jnp.maximum(
        jnp.dot(w1, x_top_ref[0].astype(f32), preferred_element_type=f32)
        + b1, 0.0)
    h1_bot = jnp.maximum(
        jnp.dot(w1, x_bot_ref[0].astype(f32), preferred_element_type=f32)
        + b1, 0.0)
    # conv2's zero padding applies to h1: halo rows outside the image are 0
    # (the clamped BlockSpec fetched a duplicate in-image row there).
    h1_top = jnp.where(j > 0, h1_top, 0.0)
    h1_bot = jnp.where(j < n_h - 1, h1_bot, 0.0)

    # ---- Edge-column masks, computed in-kernel (no HBM input). ----------
    lane_r = lax.broadcasted_iota(jnp.int32, (1, im_w), 1)
    nl_r = (lane_r < im_w - 1).astype(f32)                    # col != W-1
    nf_r = (lane_r > 0).astype(f32)                           # col != 0
    lane_f = lax.broadcasted_iota(jnp.int32, (1, thw), 1).astype(f32)
    col_f = lane_f - jnp.floor(lane_f / float(im_w)) * float(im_w)
    nl_t = (col_f < float(im_w - 1) - 0.5).astype(f32)
    nf_t = (col_f > 0.5).astype(f32)

    # ---- Build the stacked conv2 operand slab in VMEM scratch. ----------
    # rows [0:Ci]      : dx = -1 operand (slab shifted +1 lane, col W-1 zeroed)
    # rows [Ci:2Ci]    : dx =  0 operand (slab as-is)
    # rows [2Ci:3Ci]   : dx = +1 operand (slab shifted -1 lane, col 0 zeroed)
    zcol = jnp.zeros((ci, 1), f32)
    slab_ref[0:ci, pl.ds(g, 1)] = zcol                         # unwritten lane
    slab_ref[2 * ci:3 * ci, pl.ds(g + p_lanes - 1, 1)] = zcol  # unwritten lane

    slab_ref[ci:2 * ci, pl.ds(g, im_w)] = h1_top
    slab_ref[ci:2 * ci, pl.ds(g + im_w, thw)] = h1_mid
    slab_ref[ci:2 * ci, pl.ds(g + im_w + thw, im_w)] = h1_bot

    slab_ref[0:ci, pl.ds(g + 1, im_w)] = h1_top * nl_r
    slab_ref[0:ci, pl.ds(g + 1 + im_w, thw)] = h1_mid * nl_t
    slab_ref[0:ci, pl.ds(g + 1 + im_w + thw, im_w)] = h1_bot * nl_r

    slab_ref[2 * ci:3 * ci, pl.ds(g - 1, im_w)] = h1_top * nf_r
    slab_ref[2 * ci:3 * ci, pl.ds(g - 1 + im_w, thw)] = h1_mid * nf_t
    slab_ref[2 * ci:3 * ci, pl.ds(g - 1 + im_w + thw, im_w)] = h1_bot * nf_r

    # ---- ext_conv2: 3x3 conv (padding=1) as three fused K=3*Ci matmuls,
    #      accumulated in one uninterrupted f32 chain (MRB-friendly). -----
    acc = jnp.dot(w2_ref[0], slab_ref[:, pl.ds(g, thw)],
                  preferred_element_type=f32)
    acc = acc + jnp.dot(w2_ref[1], slab_ref[:, pl.ds(g + im_w, thw)],
                        preferred_element_type=f32)
    acc = acc + jnp.dot(w2_ref[2], slab_ref[:, pl.ds(g + 2 * im_w, thw)],
                        preferred_element_type=f32)
    h2 = jnp.maximum(acc + b2, 0.0)                            # (Ci, thw)

    # ---- ext_conv3: 1x1 back to C channels, bias + ReLU. ----------------
    h3 = jnp.maximum(
        jnp.dot(w3_ref[...], h2, preferred_element_type=f32) + b3, 0.0)

    # ---- Dropout2d(p=0) == identity; residual add + output ReLU. --------
    o_ref[0] = jnp.maximum(x_main + h3, 0.0).astype(o_ref.dtype)


def regular_bottleneck(x, w1, w2, w3, s1, b1, s2, b2, s3, b3, *, tile_h=None):
    """ENet RegularBottleneck forward (inference, relu=True, padding=1).

    x : (N, C, H, W) float32 or bfloat16 (PyTorch NCHW layout)
    w1: (Ci, C)        1x1 conv weight (PyTorch [out, in])
    w2: (Ci, Ci, 3, 3) OIHW 3x3 conv weight
    w3: (C, Ci)        1x1 conv weight
    s*/b*: folded BatchNorm scale/shift per channel (inference mode).
    """
    N, C, H, W = x.shape
    ci = w1.shape[0]
    assert w1.shape == (ci, C) and w3.shape == (C, ci)
    assert w2.shape == (ci, ci, 3, 3)
    assert W % 128 == 0, "W must be a multiple of 128 (TPU lane width)"

    f32 = jnp.float32

    # Zero-pad the internal channel count to a multiple of 8 so the stacked
    # conv2 scratch row blocks are sublane-aligned (exact: padded channels
    # carry zero weights and zero biases).
    cip = ((ci + 7) // 8) * 8
    if cip != ci:
        p = cip - ci
        w1 = jnp.pad(w1, ((0, p), (0, 0)))
        w2 = jnp.pad(w2, ((0, p), (0, p), (0, 0), (0, 0)))
        w3 = jnp.pad(w3, ((0, 0), (0, p)))
        s1 = jnp.pad(s1, (0, p))
        b1 = jnp.pad(b1, (0, p))
        s2 = jnp.pad(s2, (0, p))
        b2 = jnp.pad(b2, (0, p))
    ci = cip

    # Pick the largest row tile (divisor of H) whose double-buffered working
    # set stays well under the v7x VMEM budget (64 MiB/TC); v5e/v6e have more.
    if tile_h is None:
        budget = 20 * 1024 * 1024
        tile_h = 1
        for cand in range(1, H + 1):
            if H % cand:
                continue
            per_step = 4 * (4 * C * cand * W
                            + 3 * ci * ((cand + 2) * W + 2 * _GUARD))
            if per_step <= budget:
                tile_h = cand
    assert H % tile_h == 0, "H must be divisible by tile_h"
    n_h = H // tile_h
    thw = tile_h * W
    p_lanes = (tile_h + 2) * W

    # Fold BN scale into the conv weights (bias=False convs -> exact).
    w1s = w1.astype(f32) * s1.astype(f32)[:, None]
    w2s = w2.astype(f32) * s2.astype(f32)[:, None, None, None]
    w3s = w3.astype(f32) * s3.astype(f32)[:, None]
    # OIHW -> (ky, out, kx*Ci + in): one fused K=3*Ci matmul per ky.
    w2f = jnp.transpose(w2s, (2, 0, 3, 1)).reshape(3, ci, 3 * ci)
    bi = jnp.stack([b1.astype(f32), b2.astype(f32)], axis=1)    # (Ci, 2)
    bo = b3.astype(f32)[:, None]                                 # (C, 1)

    # Single flat view of x; no padded HBM copy.
    x_flat = x.reshape(N, C, H * W)

    def main_map(n, j):
        return (n, 0, j)

    def top_map(n, j):                       # row above the tile, clamped
        return (n, 0, jnp.maximum(j * tile_h - 1, 0))

    def bot_map(n, j):                       # row below the tile, clamped
        return (n, 0, jnp.minimum((j + 1) * tile_h, H - 1))

    out_flat = pl.pallas_call(
        _bottleneck_kernel,
        out_shape=jax.ShapeDtypeStruct((N, C, H * W), x.dtype),
        grid=(N, n_h),
        in_specs=[
            pl.BlockSpec((1, C, thw), main_map),                  # tile body / residual
            pl.BlockSpec((1, C, W), top_map),                     # top halo row
            pl.BlockSpec((1, C, W), bot_map),                     # bottom halo row
            pl.BlockSpec((ci, C), lambda n, j: (0, 0)),           # w1 (BN folded)
            pl.BlockSpec((3, ci, 3 * ci), lambda n, j: (0, 0, 0)),  # w2 fused taps
            pl.BlockSpec((C, ci), lambda n, j: (0, 0)),           # w3 (BN folded)
            pl.BlockSpec((ci, 2), lambda n, j: (0, 0)),           # b1, b2
            pl.BlockSpec((C, 1), lambda n, j: (0, 0)),            # b3
        ],
        out_specs=pl.BlockSpec((1, C, thw), main_map),
        scratch_shapes=[pltpu.VMEM((3 * ci, p_lanes + 2 * _GUARD), jnp.float32)],
        compiler_params=pltpu.CompilerParams(
            dimension_semantics=("parallel", "parallel"),
            vmem_limit_bytes=48 * 1024 * 1024),
    )(x_flat, x_flat, x_flat, w1s, w2f, w3s, bi, bo)

    return out_flat.reshape(N, C, H, W)


def _fold_bn(gamma, beta, mean, var, eps=1e-5):
    scale = gamma / jnp.sqrt(var + eps)
    shift = beta - mean * scale
    return scale.astype(jnp.float32), shift.astype(jnp.float32)


def _reference(x, w1, w2, w3, s1, b1, s2, b2, s3, b3):
    """Pure-JAX NCHW reference for validation."""
    relu = lambda v: jnp.maximum(v, 0.0)
    cs = lambda v: v[None, :, None, None]
    h = jnp.einsum('nchw,dc->ndhw', x, w1, precision=lax.Precision.HIGHEST)
    h = relu(h * cs(s1) + cs(b1))
    h = lax.conv_general_dilated(
        h, w2, window_strides=(1, 1), padding='SAME',
        dimension_numbers=('NCHW', 'OIHW', 'NCHW'),
        precision=lax.Precision.HIGHEST)
    h = relu(h * cs(s2) + cs(b2))
    h = jnp.einsum('nchw,dc->ndhw', h, w3, precision=lax.Precision.HIGHEST)
    h = relu(h * cs(s3) + cs(b3))
    return relu(x + h)


if __name__ == "__main__":
    def make_case(key, n, c, h, w):
        ci = c // 4
        ks = jax.random.split(key, 16)
        x = jax.random.normal(ks[0], (n, c, h, w), jnp.float32)
        w1 = 0.2 * jax.random.normal(ks[1], (ci, c), jnp.float32)
        w2 = 0.2 * jax.random.normal(ks[2], (ci, ci, 3, 3), jnp.float32)
        w3 = 0.2 * jax.random.normal(ks[3], (c, ci), jnp.float32)

        def bn(kg, kb, km, kv, ch):
            gamma = 1.0 + 0.1 * jax.random.normal(kg, (ch,), jnp.float32)
            beta = 0.1 * jax.random.normal(kb, (ch,), jnp.float32)
            mean = 0.1 * jax.random.normal(km, (ch,), jnp.float32)
            var = 1.0 + 0.1 * jax.random.uniform(kv, (ch,), jnp.float32)
            return _fold_bn(gamma, beta, mean, var)

        s1, b1 = bn(ks[4], ks[5], ks[6], ks[7], ci)
        s2, b2 = bn(ks[8], ks[9], ks[10], ks[11], ci)
        s3, b3 = bn(ks[12], ks[13], ks[14], ks[15], c)
        return (x, w1, w2, w3, s1, b1, s2, b2, s3, b3)

    key = jax.random.PRNGKey(0)
    k1, k2 = jax.random.split(key)

    # Case 1: C=32 (Ci=8), two row tiles -> exercises the clamped halo path.
    args = make_case(k1, 2, 32, 16, 128)
    ref = _reference(*args)
    out = jax.block_until_ready(regular_bottleneck(*args, tile_h=8))
    assert out.shape == ref.shape
    assert jnp.allclose(out, ref, atol=2e-2, rtol=2e-2), "f32 tiled kernel mismatch"

    # Case 2: C=16 (Ci=4 -> zero-padded to 8), auto tile_h (single tile).
    args2 = make_case(k2, 2, 16, 16, 128)
    ref2 = _reference(*args2)
    out2 = jax.block_until_ready(regular_bottleneck(*args2))
    assert jnp.allclose(out2, ref2, atol=2e-2, rtol=2e-2), "padded-Ci kernel mismatch"

    # Case 3: bf16 activations at the pallas_call boundary (v6e/v7x I/O path),
    # f32 compute inside the kernel.
    x_bf = args[0].astype(jnp.bfloat16)
    out_bf = jax.block_until_ready(regular_bottleneck(x_bf, *args[1:], tile_h=8))
    assert out_bf.dtype == jnp.bfloat16
    assert jnp.allclose(out_bf.astype(jnp.float32), ref, atol=1e-1, rtol=1e-1), \
        "bf16 I/O kernel mismatch"

    print("KERNEL_OK")
</pallas_src>

<mosaic_0001>
module attributes {stable_mosaic.version = 11 : i64} {
  func.func @_bottleneck_kernel(%arg0: i32, %arg1: i32, %arg2: memref<1x32x1024xf32, #tpu.memory_space<vmem>>, %arg3: memref<1x32x128xf32, #tpu.memory_space<vmem>>, %arg4: memref<1x32x128xf32, #tpu.memory_space<vmem>>, %arg5: memref<8x32xf32, #tpu.memory_space<vmem>>, %arg6: memref<3x8x24xf32, #tpu.memory_space<vmem>>, %arg7: memref<32x8xf32, #tpu.memory_space<vmem>>, %arg8: memref<8x2xf32, #tpu.memory_space<vmem>>, %arg9: memref<32x1xf32, #tpu.memory_space<vmem>>, %arg10: memref<1x32x1024xf32, #tpu.memory_space<vmem>>, %arg11: memref<24x1536xf32, #tpu.memory_space<vmem>>) attributes {dimension_semantics = [#tpu.dimension_semantics<parallel>, #tpu.dimension_semantics<parallel>], iteration_bounds = array<i64: 2, 2>, scalar_prefetch = 0 : i64, scratch_operands = 1 : i64, tpu.core_type = #tpu.core_type<tc>, window_params = [{transform_indices = @transform_0, window_bounds = array<i64: 1, 32, 1024>}, {transform_indices = @transform_1, window_bounds = array<i64: 1, 32, 128>}, {transform_indices = @transform_2, window_bounds = array<i64: 1, 32, 128>}, {pipeline_mode = #tpu.pipeline_mode<synchronous>, transform_indices = @transform_3, window_bounds = array<i64: 8, 32>}, {pipeline_mode = #tpu.pipeline_mode<synchronous>, transform_indices = @transform_4, window_bounds = array<i64: 3, 8, 24>}, {pipeline_mode = #tpu.pipeline_mode<synchronous>, transform_indices = @transform_5, window_bounds = array<i64: 32, 8>}, {pipeline_mode = #tpu.pipeline_mode<synchronous>, transform_indices = @transform_6, window_bounds = array<i64: 8, 2>}, {pipeline_mode = #tpu.pipeline_mode<synchronous>, transform_indices = @transform_7, window_bounds = array<i64: 32, 1>}, {transform_indices = @transform_8, window_bounds = array<i64: 1, 32, 1024>}]} {
    %c0 = arith.constant 0 : index
    %c0_0 = arith.constant 0 : index
    %0 = vector.load %arg8[%c0, %c0_0] : memref<8x2xf32, #tpu.memory_space<vmem>>, vector<8x1xf32>
    %c0_1 = arith.constant 0 : index
    %c1 = arith.constant 1 : index
    %1 = vector.load %arg8[%c0_1, %c1] : memref<8x2xf32, #tpu.memory_space<vmem>>, vector<8x1xf32>
    %c0_2 = arith.constant 0 : index
    %c0_3 = arith.constant 0 : index
    %2 = vector.load %arg9[%c0_2, %c0_3] : memref<32x1xf32, #tpu.memory_space<vmem>>, vector<32x1xf32>
    %c0_4 = arith.constant 0 : index
    %c0_5 = arith.constant 0 : index
    %c0_6 = arith.constant 0 : index
    %3 = vector.load %arg2[%c0_4, %c0_5, %c0_6] : memref<1x32x1024xf32, #tpu.memory_space<vmem>>, vector<1x32x1024xf32>
    %4 = vector.shape_cast %3 : vector<1x32x1024xf32> to vector<32x1024xf32>
    %c0_7 = arith.constant 0 : index
    %c0_8 = arith.constant 0 : index
    %5 = vector.load %arg5[%c0_7, %c0_8] : memref<8x32xf32, #tpu.memory_space<vmem>>, vector<8x32xf32>
    %cst = arith.constant dense<0.000000e+00> : vector<8x1024xf32>
    %6 = tpu.matmul %5, %4, %cst {dimension_numbers = #tpu.dot_dimension_numbers<[1], [0], [0], [1], [0, 0, 1, 1], [], []>} : vector<8x32xf32>, vector<32x1024xf32>, vector<8x1024xf32> -> vector<8x1024xf32>
    %7 = vector.broadcast %0 : vector<8x1xf32> to vector<8x1024xf32>
    %8 = arith.addf %6, %7 : vector<8x1024xf32>
    %cst_9 = arith.constant 0.000000e+00 : f32
    %9 = vector.broadcast %cst_9 : f32 to vector<8x1024xf32>
    %10 = arith.maximumf %8, %9 : vector<8x1024xf32>
    %c0_10 = arith.constant 0 : index
    %c0_11 = arith.constant 0 : index
    %c0_12 = arith.constant 0 : index
    %11 = vector.load %arg3[%c0_10, %c0_11, %c0_12] : memref<1x32x128xf32, #tpu.memory_space<vmem>>, vector<1x32x128xf32>
    %12 = vector.shape_cast %11 : vector<1x32x128xf32> to vector<32x128xf32>
    %cst_13 = arith.constant dense<0.000000e+00> : vector<8x128xf32>
    %13 = tpu.matmul %5, %12, %cst_13 {dimension_numbers = #tpu.dot_dimension_numbers<[1], [0], [0], [1], [0, 0, 1, 1], [], []>} : vector<8x32xf32>, vector<32x128xf32>, vector<8x128xf32> -> vector<8x128xf32>
    %14 = vector.broadcast %0 : vector<8x1xf32> to vector<8x128xf32>
    %15 = arith.addf %13, %14 : vector<8x128xf32>
    %cst_14 = arith.constant 0.000000e+00 : f32
    %16 = vector.broadcast %cst_14 : f32 to vector<8x128xf32>
    %17 = arith.maximumf %15, %16 : vector<8x128xf32>
    %c0_15 = arith.constant 0 : index
    %c0_16 = arith.constant 0 : index
    %c0_17 = arith.constant 0 : index
    %18 = vector.load %arg4[%c0_15, %c0_16, %c0_17] : memref<1x32x128xf32, #tpu.memory_space<vmem>>, vector<1x32x128xf32>
    %19 = vector.shape_cast %18 : vector<1x32x128xf32> to vector<32x128xf32>
    %cst_18 = arith.constant dense<0.000000e+00> : vector<8x128xf32>
    %20 = tpu.matmul %5, %19, %cst_18 {dimension_numbers = #tpu.dot_dimension_numbers<[1], [0], [0], [1], [0, 0, 1, 1], [], []>} : vector<8x32xf32>, vector<32x128xf32>, vector<8x128xf32> -> vector<8x128xf32>
    %21 = vector.broadcast %0 : vector<8x1xf32> to vector<8x128xf32>
    %22 = arith.addf %20, %21 : vector<8x128xf32>
    %cst_19 = arith.constant 0.000000e+00 : f32
    %23 = vector.broadcast %cst_19 : f32 to vector<8x128xf32>
    %24 = arith.maximumf %22, %23 : vector<8x128xf32>
    %c0_i32 = arith.constant 0 : i32
    %25 = arith.cmpi sgt, %arg1, %c0_i32 : i32
    %cst_20 = arith.constant 0.000000e+00 : f32
    %26 = vector.broadcast %cst_20 : f32 to vector<8x128xf32>
    %27 = arith.select %25, %17, %26 : vector<8x128xf32>
    %c1_i32 = arith.constant 1 : i32
    %28 = arith.cmpi slt, %arg1, %c1_i32 : i32
    %cst_21 = arith.constant 0.000000e+00 : f32
    %29 = vector.broadcast %cst_21 : f32 to vector<8x128xf32>
    %30 = arith.select %28, %24, %29 : vector<8x128xf32>
    %31 = tpu.iota {dimensions = array<i32: 1>} : vector<1x128xi32>
    %c127_i32 = arith.constant 127 : i32
    %32 = vector.broadcast %c127_i32 : i32 to vector<1x128xi32>
    %33 = arith.cmpi slt, %31, %32 : vector<1x128xi32>
    %34 = arith.extui %33 : vector<1x128xi1> to vector<1x128xi32>
    %35 = arith.sitofp %34 : vector<1x128xi32> to vector<1x128xf32>
    %c0_i32_22 = arith.constant 0 : i32
    %36 = vector.broadcast %c0_i32_22 : i32 to vector<1x128xi32>
    %37 = arith.cmpi sgt, %31, %36 : vector<1x128xi32>
    %38 = arith.extui %37 : vector<1x128xi1> to vector<1x128xi32>
    %39 = arith.sitofp %38 : vector<1x128xi32> to vector<1x128xf32>
    %40 = tpu.iota {dimensions = array<i32: 1>} : vector<1x1024xi32>
    %41 = arith.sitofp %40 : vector<1x1024xi32> to vector<1x1024xf32>
    %cst_23 = arith.constant 1.280000e+02 : f32
    %42 = vector.broadcast %cst_23 : f32 to vector<1x1024xf32>
    %43 = arith.divf %41, %42 : vector<1x1024xf32>
    %44 = math.floor %43 : vector<1x1024xf32>
    %cst_24 = arith.constant 1.280000e+02 : f32
    %45 = vector.broadcast %cst_24 : f32 to vector<1x1024xf32>
    %46 = arith.mulf %44, %45 : vector<1x1024xf32>
    %47 = arith.subf %41, %46 : vector<1x1024xf32>
    %cst_25 = arith.constant 1.265000e+02 : f32
    %48 = vector.broadcast %cst_25 : f32 to vector<1x1024xf32>
    %49 = arith.cmpf olt, %47, %48 : vector<1x1024xf32>
    %50 = arith.extui %49 : vector<1x1024xi1> to vector<1x1024xi32>
    %51 = arith.sitofp %50 : vector<1x1024xi32> to vector<1x1024xf32>
    %cst_26 = arith.constant 5.000000e-01 : f32
    %52 = vector.broadcast %cst_26 : f32 to vector<1x1024xf32>
    %53 = arith.cmpf ogt, %47, %52 : vector<1x1024xf32>
    %54 = arith.extui %53 : vector<1x1024xi1> to vector<1x1024xi32>
    %55 = arith.sitofp %54 : vector<1x1024xi32> to vector<1x1024xf32>
    %cst_27 = arith.constant 0.000000e+00 : f32
    %56 = vector.broadcast %cst_27 : f32 to vector<8x1xf32>
    %c0_28 = arith.constant 0 : index
    %c128 = arith.constant 128 : index
    %57 = vector.load %arg11[%c0_28, %c128] : memref<24x1536xf32, #tpu.memory_space<vmem>>, vector<8x1xf32>
    tpu.vector_store %arg11[%c0_28, %c128], %56 {strides = array<i32>} : memref<24x1536xf32, #tpu.memory_space<vmem>>, vector<8x1xf32>,
    %c16 = arith.constant 16 : index
    %c1407 = arith.constant 1407 : index
    %58 = vector.load %arg11[%c16, %c1407] : memref<24x1536xf32, #tpu.memory_space<vmem>>, vector<8x1xf32>
    tpu.vector_store %arg11[%c16, %c1407], %56 {strides = array<i32>} : memref<24x1536xf32, #tpu.memory_space<vmem>>, vector<8x1xf32>,
    %c8 = arith.constant 8 : index
    %c128_29 = arith.constant 128 : index
    %59 = vector.load %arg11[%c8, %c128_29] : memref<24x1536xf32, #tpu.memory_space<vmem>>, vector<8x128xf32>
    tpu.vector_store %arg11[%c8, %c128_29], %27 {strides = array<i32>} : memref<24x1536xf32, #tpu.memory_space<vmem>>, vector<8x128xf32>,
    %c8_30 = arith.constant 8 : index
    %c256 = arith.constant 256 : index
    %60 = vector.load %arg11[%c8_30, %c256] : memref<24x1536xf32, #tpu.memory_space<vmem>>, vector<8x1024xf32>
    tpu.vector_store %arg11[%c8_30, %c256], %10 {strides = array<i32>} : memref<24x1536xf32, #tpu.memory_space<vmem>>, vector<8x1024xf32>,
    %c8_31 = arith.constant 8 : index
    %c1280 = arith.constant 1280 : index
    %61 = vector.load %arg11[%c8_31, %c1280] : memref<24x1536xf32, #tpu.memory_space<vmem>>, vector<8x128xf32>
    tpu.vector_store %arg11[%c8_31, %c1280], %30 {strides = array<i32>} : memref<24x1536xf32, #tpu.memory_space<vmem>>, vector<8x128xf32>,
    %62 = vector.broadcast %35 : vector<1x128xf32> to vector<8x128xf32>
    %63 = arith.mulf %27, %62 : vector<8x128xf32>
    %c0_32 = arith.constant 0 : index
    %c129 = arith.constant 129 : index
    %64 = vector.load %arg11[%c0_32, %c129] : memref<24x1536xf32, #tpu.memory_space<vmem>>, vector<8x128xf32>
    tpu.vector_store %arg11[%c0_32, %c129], %63 {strides = array<i32>} : memref<24x1536xf32, #tpu.memory_space<vmem>>, vector<8x128xf32>,
    %65 = vector.broadcast %51 : vector<1x1024xf32> to vector<8x1024xf32>
    %66 = arith.mulf %10, %65 : vector<8x1024xf32>
    %c0_33 = arith.constant 0 : index
    %c257 = arith.constant 257 : index
    %67 = vector.load %arg11[%c0_33, %c257] : memref<24x1536xf32, #tpu.memory_space<vmem>>, vector<8x1024xf32>
    tpu.vector_store %arg11[%c0_33, %c257], %66 {strides = array<i32>} : memref<24x1536xf32, #tpu.memory_space<vmem>>, vector<8x1024xf32>,
    %68 = vector.broadcast %35 : vector<1x128xf32> to vector<8x128xf32>
    %69 = arith.mulf %30, %68 : vector<8x128xf32>
    %c0_34 = arith.constant 0 : index
    %c1281 = arith.constant 1281 : index
    %70 = vector.load %arg11[%c0_34, %c1281] : memref<24x1536xf32, #tpu.memory_space<vmem>>, vector<8x128xf32>
    tpu.vector_store %arg11[%c0_34, %c1281], %69 {strides = array<i32>} : memref<24x1536xf32, #tpu.memory_space<vmem>>, vector<8x128xf32>,
    %71 = vector.broadcast %39 : vector<1x128xf32> to vector<8x128xf32>
    %72 = arith.mulf %27, %71 : vector<8x128xf32>
    %c16_35 = arith.constant 16 : index
    %c127 = arith.constant 127 : index
    %73 = vector.load %arg11[%c16_35, %c127] : memref<24x1536xf32, #tpu.memory_space<vmem>>, vector<8x128xf32>
    tpu.vector_store %arg11[%c16_35, %c127], %72 {strides = array<i32>} : memref<24x1536xf32, #tpu.memory_space<vmem>>, vector<8x128xf32>,
    %74 = vector.broadcast %55 : vector<1x1024xf32> to vector<8x1024xf32>
    %75 = arith.mulf %10, %74 : vector<8x1024xf32>
    %c16_36 = arith.constant 16 : index
    %c255 = arith.constant 255 : index
    %76 = vector.load %arg11[%c16_36, %c255] : memref<24x1536xf32, #tpu.memory_space<vmem>>, vector<8x1024xf32>
    tpu.vector_store %arg11[%c16_36, %c255], %75 {strides = array<i32>} : memref<24x1536xf32, #tpu.memory_space<vmem>>, vector<8x1024xf32>,
    %77 = vector.broadcast %39 : vector<1x128xf32> to vector<8x128xf32>
    %78 = arith.mulf %30, %77 : vector<8x128xf32>
    %c16_37 = arith.constant 16 : index
    %c1279 = arith.constant 1279 : index
    %79 = vector.load %arg11[%c16_37, %c1279] : memref<24x1536xf32, #tpu.memory_space<vmem>>, vector<8x128xf32>
    tpu.vector_store %arg11[%c16_37, %c1279], %78 {strides = array<i32>} : memref<24x1536xf32, #tpu.memory_space<vmem>>, vector<8x128xf32>,
    %c0_38 = arith.constant 0 : index
    %c0_39 = arith.constant 0 : index
    %c0_40 = arith.constant 0 : index
    %80 = vector.load %arg6[%c0_38, %c0_39, %c0_40] : memref<3x8x24xf32, #tpu.memory_space<vmem>>, vector<1x8x24xf32>
    %81 = vector.shape_cast %80 : vector<1x8x24xf32> to vector<8x24xf32>
    %c0_41 = arith.constant 0 : index
    %c128_42 = arith.constant 128 : index
    %82 = vector.load %arg11[%c0_41, %c128_42] : memref<24x1536xf32, #tpu.memory_space<vmem>>, vector<24x1024xf32>
    %cst_43 = arith.constant dense<0.000000e+00> : vector<8x1024xf32>
    %83 = tpu.matmul %81, %82, %cst_43 {dimension_numbers = #tpu.dot_dimension_numbers<[1], [0], [0], [1], [0, 0, 1, 1], [], []>} : vector<8x24xf32>, vector<24x1024xf32>, vector<8x1024xf32> -> vector<8x1024xf32>
    %c1_44 = arith.constant 1 : index
    %c0_45 = arith.constant 0 : index
    %c0_46 = arith.constant 0 : index
    %84 = vector.load %arg6[%c1_44, %c0_45, %c0_46] : memref<3x8x24xf32, #tpu.memory_space<vmem>>, vector<1x8x24xf32>
    %85 = vector.shape_cast %84 : vector<1x8x24xf32> to vector<8x24xf32>
    %c0_47 = arith.constant 0 : index
    %c256_48 = arith.constant 256 : index
    %86 = vector.load %arg11[%c0_47, %c256_48] : memref<24x1536xf32, #tpu.memory_space<vmem>>, vector<24x1024xf32>
    %cst_49 = arith.constant dense<0.000000e+00> : vector<8x1024xf32>
    %87 = tpu.matmul %85, %86, %cst_49 {dimension_numbers = #tpu.dot_dimension_numbers<[1], [0], [0], [1], [0, 0, 1, 1], [], []>} : vector<8x24xf32>, vector<24x1024xf32>, vector<8x1024xf32> -> vector<8x1024xf32>
    %88 = arith.addf %83, %87 : vector<8x1024xf32>
    %c2 = arith.constant 2 : index
    %c0_50 = arith.constant 0 : index
    %c0_51 = arith.constant 0 : index
    %89 = vector.load %arg6[%c2, %c0_50, %c0_51] : memref<3x8x24xf32, #tpu.memory_space<vmem>>, vector<1x8x24xf32>
    %90 = vector.shape_cast %89 : vector<1x8x24xf32> to vector<8x24xf32>
    %c0_52 = arith.constant 0 : index
    %c384 = arith.constant 384 : index
    %91 = vector.load %arg11[%c0_52, %c384] : memref<24x1536xf32, #tpu.memory_space<vmem>>, vector<24x1024xf32>
    %cst_53 = arith.constant dense<0.000000e+00> : vector<8x1024xf32>
    %92 = tpu.matmul %90, %91, %cst_53 {dimension_numbers = #tpu.dot_dimension_numbers<[1], [0], [0], [1], [0, 0, 1, 1], [], []>} : vector<8x24xf32>, vector<24x1024xf32>, vector<8x1024xf32> -> vector<8x1024xf32>
    %93 = arith.addf %88, %92 : vector<8x1024xf32>
    %94 = vector.broadcast %1 : vector<8x1xf32> to vector<8x1024xf32>
    %95 = arith.addf %93, %94 : vector<8x1024xf32>
    %cst_54 = arith.constant 0.000000e+00 : f32
    %96 = vector.broadcast %cst_54 : f32 to vector<8x1024xf32>
    %97 = arith.maximumf %95, %96 : vector<8x1024xf32>
    %c0_55 = arith.constant 0 : index
    %c0_56 = arith.constant 0 : index
    %98 = vector.load %arg7[%c0_55, %c0_56] : memref<32x8xf32, #tpu.memory_space<vmem>>, vector<32x8xf32>
    %cst_57 = arith.constant dense<0.000000e+00> : vector<32x1024xf32>
    %99 = tpu.matmul %98, %97, %cst_57 {dimension_numbers = #tpu.dot_dimension_numbers<[1], [0], [0], [1], [0, 0, 1, 1], [], []>} : vector<32x8xf32>, vector<8x1024xf32>, vector<32x1024xf32> -> vector<32x1024xf32>
    %100 = vector.broadcast %2 : vector<32x1xf32> to vector<32x1024xf32>
    %101 = arith.addf %99, %100 : vector<32x1024xf32>
    %cst_58 = arith.constant 0.000000e+00 : f32
    %102 = vector.broadcast %cst_58 : f32 to vector<32x1024xf32>
    %103 = arith.maximumf %101, %102 : vector<32x1024xf32>
    %104 = arith.addf %4, %103 : vector<32x1024xf32>
    %cst_59 = arith.constant 0.000000e+00 : f32
    %105 = vector.broadcast %cst_59 : f32 to vector<32x1024xf32>
    %106 = arith.maximumf %104, %105 : vector<32x1024xf32>
    %c0_60 = arith.constant 0 : index
    %c0_61 = arith.constant 0 : index
    %c0_62 = arith.constant 0 : index
    %107 = vector.load %arg10[%c0_60, %c0_61, %c0_62] : memref<1x32x1024xf32, #tpu.memory_space<vmem>>, vector<1x32x1024xf32>
    %108 = vector.shape_cast %107 : vector<1x32x1024xf32> to vector<32x1024xf32>
    %109 = vector.shape_cast %106 : vector<32x1024xf32> to vector<1x32x1024xf32>
    tpu.vector_store %arg10[%c0_60, %c0_61, %c0_62], %109 {strides = array<i32>} : memref<1x32x1024xf32, #tpu.memory_space<vmem>>, vector<1x32x1024xf32>,
    return
  }
  func.func @transform_0(%arg0: i32, %arg1: i32) -> (i32, i32, i32) {
    %c0_i32 = arith.constant 0 : i32
    %c0_i32_0 = arith.constant 0 : i32
    return %arg0, %c0_i32, %arg1 : i32, i32, i32
  }
  func.func @transform_1(%arg0: i32, %arg1: i32) -> (i32, i32, i32) {
    %c8_i32 = arith.constant 8 : i32
    %0 = arith.muli %arg1, %c8_i32 : i32
    %c1_i32 = arith.constant 1 : i32
    %1 = arith.subi %0, %c1_i32 : i32
    %c0_i32 = arith.constant 0 : i32
    %2 = arith.maxsi %1, %c0_i32 : i32
    %c0_i32_0 = arith.constant 0 : i32
    %c0_i32_1 = arith.constant 0 : i32
    return %arg0, %c0_i32_0, %2 : i32, i32, i32
  }
  func.func @transform_2(%arg0: i32, %arg1: i32) -> (i32, i32, i32) {
    %c1_i32 = arith.constant 1 : i32
    %0 = arith.addi %arg1, %c1_i32 : i32
    %c8_i32 = arith.constant 8 : i32
    %1 = arith.muli %0, %c8_i32 : i32
    %c15_i32 = arith.constant 15 : i32
    %2 = arith.minsi %1, %c15_i32 : i32
    %c0_i32 = arith.constant 0 : i32
    %c0_i32_0 = arith.constant 0 : i32
    return %arg0, %c0_i32, %2 : i32, i32, i32
  }
  func.func @transform_3(%arg0: i32, %arg1: i32) -> (i32, i32) {
    %c0_i32 = arith.constant 0 : i32
    %c0_i32_0 = arith.constant 0 : i32
    %c0_i32_1 = arith.constant 0 : i32
    return %c0_i32, %c0_i32_0 : i32, i32
  }
  func.func @transform_4(%arg0: i32, %arg1: i32) -> (i32, i32, i32) {
    %c0_i32 = arith.constant 0 : i32
    %c0_i32_0 = arith.constant 0 : i32
    %c0_i32_1 = arith.constant 0 : i32
    %c0_i32_2 = arith.constant 0 : i32
    return %c0_i32, %c0_i32_0, %c0_i32_1 : i32, i32, i32
  }
  func.func @transform_5(%arg0: i32, %arg1: i32) -> (i32, i32) {
    %c0_i32 = arith.constant 0 : i32
    %c0_i32_0 = arith.constant 0 : i32
    %c0_i32_1 = arith.constant 0 : i32
    return %c0_i32, %c0_i32_0 : i32, i32
  }
  func.func @transform_6(%arg0: i32, %arg1: i32) -> (i32, i32) {
    %c0_i32 = arith.constant 0 : i32
    %c0_i32_0 = arith.constant 0 : i32
    %c0_i32_1 = arith.constant 0 : i32
    return %c0_i32, %c0_i32_0 : i32, i32
  }
  func.func @transform_7(%arg0: i32, %arg1: i32) -> (i32, i32) {
    %c0_i32 = arith.constant 0 : i32
    %c0_i32_0 = arith.constant 0 : i32
    %c0_i32_1 = arith.constant 0 : i32
    return %c0_i32, %c0_i32_0 : i32, i32
  }
  func.func @transform_8(%arg0: i32, %arg1: i32) -> (i32, i32, i32) {
    %c0_i32 = arith.constant 0 : i32
    %c0_i32_0 = arith.constant 0 : i32
    return %arg0, %c0_i32, %arg1 : i32, i32, i32
  }
}

</mosaic_0001>

<llo_original>
// kernel: tpu_custom_call.1
$region0: #{tpu_custom_call.1}
  #allocation0 [shape = 'u32[]', space=smem, size = 0x4, offset = 0x4, fixed_abs, tag = 'smem constant byte address 0x4 - core index']
  #allocation1 [shape = 'u32[72,128]{1,0:T(1,128)}', space=vmem, size = 0x9000, scoped, tag = 'internal scratch']
  #allocation2 [shape = 'f32[24,1536]{1,0:T(8,128)}', space=vmem, size = 0x24000, scoped, tag = 'scratch operand']
  %s0 = inlined_call_operand.hbm [shape: f32[2,32,2048], index: 0, kind: input, shape index: {}]
  %s1 = inlined_call_operand.hbm [shape: f32[2,32,2048], index: 1, kind: input, shape index: {}]
  %s2 = inlined_call_operand.hbm [shape: f32[2,32,2048], index: 2, kind: input, shape index: {}]
  %s3 = inlined_call_operand.vmem [shape: f32[8,32], index: 3, kind: input, shape index: {}]
  %s4 = inlined_call_operand.vmem [shape: f32[3,8,24], index: 4, kind: input, shape index: {}]
  %s5 = inlined_call_operand.vmem [shape: f32[32,8], index: 5, kind: input, shape index: {}]
  %s6 = inlined_call_operand.vmem [shape: f32[8,2], index: 6, kind: input, shape index: {}]
  %s7 = inlined_call_operand.vmem [shape: f32[32,1], index: 7, kind: input, shape index: {}]
  %s8 = inlined_call_operand.hbm [shape: f32[2,32,2048], index: 8, kind: output, shape index: {}]
  %s9 = sld [smem:[#allocation0]]
  $region77: #{tpu_custom_call.1} parent=0
    _
  %s11 = ssub.s32 1, %s9
  %s12 = scalar_select 0, %s11, %s9
  $region1: #{tpu_custom_call.1} parent=0
    #allocation3 [shape = 'u8[262144]{0}', space=vmem, size = 0x40000, scoped, tag = 'input window, operand 0']
    #allocation4 [shape = 's32[2]{0}', space=sflag, size = 0x8, scoped, tag = 'scoped memory for tpu_custom_call.1']
    #allocation5 [shape = 's32[2]{0}', space=sflag, size = 0x8, scoped, tag = 'scoped memory for tpu_custom_call.1']
    #allocation6 [shape = 'u8[32768]{0}', space=vmem, size = 0x8000, scoped, tag = 'input window, operand 1']
    #allocation7 [shape = 's32[2]{0}', space=sflag, size = 0x8, scoped, tag = 'scoped memory for tpu_custom_call.1']
    #allocation8 [shape = 'u8[32768]{0}', space=vmem, size = 0x8000, scoped, tag = 'input window, operand 2']
    #allocation9 [shape = 'u8[262144]{0}', space=vmem, size = 0x40000, scoped, tag = 'output window, operand 0']
    %13 = vsyncpa [#allocation4], 0
    %s14 = scalar_lea.sflag [#allocation4], 1
    %15 = vsyncpa %s14, 0
    %16 = vsyncpa [#allocation7], 0
    %s17 = scalar_lea.sflag [#allocation7], 1
    %18 = vsyncpa %s17, 0
    %19 = vsyncpa [#allocation5], 0
    %s20 = scalar_lea.sflag [#allocation5], 1
    %21 = vsyncpa %s20, 0
    loop: start=0, step=1, limit=6
    $region2: #{tpu_custom_call.1} parent=1 // loop_pre_header
      _
    $region3: #{tpu_custom_call.1} parent=1 // loop_header
      %s23 = sphi 0, %s27
      %p24 = scmp.ge.s32.totalorder %s23, 6
      %s30 = sphi 0, %s42
      %s31 = sphi 0, %s38
      %s32 = sphi 0, %s30
      %s33 = sphi 0, %s31
      %s34 = sphi 0, %s32
      %s35 = sphi 0, %s33
      %s47 = sphi 0, %s49
      %s50 = sphi 0, %s47
      %s51 = sphi 0, %s50
      %s67 = sphi 0, %s51
      %s83 = sphi 0, %s85
      %s86 = sphi 0, %s83
      %s87 = sphi 0, %s86
      %s103 = sphi 0, %s87
      %s119 = sphi 0, %s121
      %s122 = sphi 0, %s119
      %s123 = sphi 0, %s122
      %s139 = sphi 0, %s123
      %s143 = sphi 0, %s143
      %s145 = sphi 0, %s143
      %s146 = sphi 0, %s145
      %s160 = sphi 0, %s146
      %s164 = sphi 0, %s164
      %s166 = sphi 0, %s164
      %s167 = sphi 0, %s166
      %s181 = sphi 0, %s167
      %s185 = sphi 0, %s185
      %s187 = sphi 0, %s185
      %s188 = sphi 0, %s187
      %s202 = sphi 0, %s188
      %s206 = sphi 0, %s206
      %s208 = sphi 0, %s206
      %s209 = sphi 0, %s208
      %s223 = sphi 0, %s209
      %s227 = sphi 0, %s227
      %s229 = sphi 0, %s227
      %s230 = sphi 0, %s229
      %s244 = sphi 0, %s230
      %s252 = sphi 0, %s254
      %s255 = sphi 0, %s252
      %s256 = sphi 0, %s255
      %s272 = sphi 0, %s256
    $region4: #{tpu_custom_call.1} parent=1 // loop_header_branch
      %26 = sbr.rel (%p24) target = $region8
    $region5: #{tpu_custom_call.1} parent=1 // loop_body
      %s28 = ssub.s32 %s23, 1
      %s29 = ssub.s32 %s23, 2
      %s36 = sadd.s32 1, %s31
      %p37 = scmp.ge.s32.totalorder %s36, 2
      %s38 = scalar_select %p37, 0, %s36
      %s39 = sadd.s32 1, %s30
      %s40 = scalar_select %p37, %s39, %s30
      %p41 = scmp.ge.s32.totalorder %s40, 2
      %s42 = scalar_select %p41, 0, %s40
      %s43 = ssub.s32 %s30, %s42
      %s44 = ssub.s32 %s31, %s38
      %s45 = sor.u32 %s43, %s44
      %p46 = scmp.eq.s32.totalorder %s45, 0
      %s48 = sadd.s32 %s47, 1
      %s49 = scalar_select %p46, %s47, %s48
      %p52 = pneg %p46
      %p53 = scmp.eq.s32.totalorder %s23, 3
      %p54 = por %p52, %p53
      %p55 = scmp.ne.s32.totalorder %s47, %s50
      %p56 = scmp.eq.s32.totalorder %s23, 0
      %p57 = por %p55, %p56
      %p58 = scmp.ne.s32.totalorder %s47, %s50
      %p59 = scmp.eq.s32.totalorder %s28, 3
      %p60 = por %p58, %p59
      %p61 = scmp.ne.s32.totalorder %s50, %s51
      %p62 = scmp.eq.s32.totalorder %s28, 0
      %p63 = por %p61, %p62
      %p64 = scmp.ne.s32.totalorder %s50, %s51
      %p65 = scmp.eq.s32.totalorder %s29, 3
      %p66 = por %p64, %p65
      %p68 = scmp.ne.s32.totalorder %s51, %s67
      %p69 = scmp.eq.s32.totalorder %s29, 0
      %p70 = por %p68, %p69
      %s71 = smul.u32 %s31, 8
      %s72 = ssub.s32 %s71, 1
      %p73 = scmp.gt.s32.totalorder %s72, 0
      %s74 = scalar_select %p73, %s72, 0
      %s75 = smul.u32 %s38, 8
      %s76 = ssub.s32 %s75, 1
      %p77 = scmp.gt.s32.totalorder %s76, 0
      %s78 = scalar_select %p77, %s76, 0
      %s79 = ssub.s32 %s30, %s42
      %s80 = ssub.s32 %s74, %s78
      %s81 = sor.u32 %s79, %s80
      %p82 = scmp.eq.s32.totalorder %s81, 0
      %s84 = sadd.s32 %s83, 1
      %s85 = scalar_select %p82, %s83, %s84
      %p88 = pneg %p82
      %p89 = scmp.eq.s32.totalorder %s23, 3
      %p90 = por %p88, %p89
      %p91 = scmp.ne.s32.totalorder %s83, %s86
      %p92 = scmp.eq.s32.totalorder %s23, 0
      %p93 = por %p91, %p92
      %p94 = scmp.ne.s32.totalorder %s83, %s86
      %p95 = scmp.eq.s32.totalorder %s28, 3
      %p96 = por %p94, %p95
      %p97 = scmp.ne.s32.totalorder %s86, %s87
      %p98 = scmp.eq.s32.totalorder %s28, 0
      %p99 = por %p97, %p98
      %p100 = scmp.ne.s32.totalorder %s86, %s87
      %p101 = scmp.eq.s32.totalorder %s29, 3
      %p102 = por %p100, %p101
      %p104 = scmp.ne.s32.totalorder %s87, %s103
      %p105 = scmp.eq.s32.totalorder %s29, 0
      %p106 = por %p104, %p105
      %s107 = sadd.s32 %s31, 1
      %s108 = smul.u32 %s107, 8
      %p109 = scmp.lt.s32.totalorder %s108, 15
      %s110 = scalar_select %p109, %s108, 15
      %s111 = sadd.s32 %s38, 1
      %s112 = smul.u32 %s111, 8
      %p113 = scmp.lt.s32.totalorder %s112, 15
      %s114 = scalar_select %p113, %s112, 15
      %s115 = ssub.s32 %s30, %s42
      %s116 = ssub.s32 %s110, %s114
      %s117 = sor.u32 %s115, %s116
      %p118 = scmp.eq.s32.totalorder %s117, 0
      %s120 = sadd.s32 %s119, 1
      %s121 = scalar_select %p118, %s119, %s120
      %p124 = pneg %p118
      %p125 = scmp.eq.s32.totalorder %s23, 3
      %p126 = por %p124, %p125
      %p127 = scmp.ne.s32.totalorder %s119, %s122
      %p128 = scmp.eq.s32.totalorder %s23, 0
      %p129 = por %p127, %p128
      %p130 = scmp.ne.s32.totalorder %s119, %s122
      %p131 = scmp.eq.s32.totalorder %s28, 3
      %p132 = por %p130, %p131
      %p133 = scmp.ne.s32.totalorder %s122, %s123
      %p134 = scmp.eq.s32.totalorder %s28, 0
      %p135 = por %p133, %p134
      %p136 = scmp.ne.s32.totalorder %s122, %s123
      %p137 = scmp.eq.s32.totalorder %s29, 3
      %p138 = por %p136, %p137
      %p140 = scmp.ne.s32.totalorder %s123, %s139
      %p141 = scmp.eq.s32.totalorder %s29, 0
      %p142 = por %p140, %p141
      %s144 = sadd.s32 %s143, 1
      %p147 = scmp.eq.s32.totalorder %s23, 3
      %p148 = scmp.ne.s32.totalorder %s143, %s145
      %p149 = scmp.eq.s32.totalorder %s23, 0
      %p150 = por %p148, %p149
      %p151 = scmp.ne.s32.totalorder %s143, %s145
      %p152 = scmp.eq.s32.totalorder %s28, 3
      %p153 = por %p151, %p152
      %p154 = scmp.ne.s32.totalorder %s145, %s146
      %p155 = scmp.eq.s32.totalorder %s28, 0
      %p156 = por %p154, %p155
      %p157 = scmp.ne.s32.totalorder %s145, %s146
      %p158 = scmp.eq.s32.totalorder %s29, 3
      %p159 = por %p157, %p158
      %p161 = scmp.ne.s32.totalorder %s146, %s160
      %p162 = scmp.eq.s32.totalorder %s29, 0
      %p163 = por %p161, %p162
      %s165 = sadd.s32 %s164, 1
      %p168 = scmp.eq.s32.totalorder %s23, 3
      %p169 = scmp.ne.s32.totalorder %s164, %s166
      %p170 = scmp.eq.s32.totalorder %s23, 0
      %p171 = por %p169, %p170
      %p172 = scmp.ne.s32.totalorder %s164, %s166
      %p173 = scmp.eq.s32.totalorder %s28, 3
      %p174 = por %p172, %p173
      %p175 = scmp.ne.s32.totalorder %s166, %s167
      %p176 = scmp.eq.s32.totalorder %s28, 0
      %p177 = por %p175, %p176
      %p178 = scmp.ne.s32.totalorder %s166, %s167
      %p179 = scmp.eq.s32.totalorder %s29, 3
      %p180 = por %p178, %p179
      %p182 = scmp.ne.s32.totalorder %s167, %s181
      %p183 = scmp.eq.s32.totalorder %s29, 0
      %p184 = por %p182, %p183
      %s186 = sadd.s32 %s185, 1
      %p189 = scmp.eq.s32.totalorder %s23, 3
      %p190 = scmp.ne.s32.totalorder %s185, %s187
      %p191 = scmp.eq.s32.totalorder %s23, 0
      %p192 = por %p190, %p191
      %p193 = scmp.ne.s32.totalorder %s185, %s187
      %p194 = scmp.eq.s32.totalorder %s28, 3
      %p195 = por %p193, %p194
      %p196 = scmp.ne.s32.totalorder %s187, %s188
      %p197 = scmp.eq.s32.totalorder %s28, 0
      %p198 = por %p196, %p197
      %p199 = scmp.ne.s32.totalorder %s187, %s188
      %p200 = scmp.eq.s32.totalorder %s29, 3
      %p201 = por %p199, %p200
      %p203 = scmp.ne.s32.totalorder %s188, %s202
      %p204 = scmp.eq.s32.totalorder %s29, 0
      %p205 = por %p203, %p204
      %s207 = sadd.s32 %s206, 1
      %p210 = scmp.eq.s32.totalorder %s23, 3
      %p211 = scmp.ne.s32.totalorder %s206, %s208
      %p212 = scmp.eq.s32.totalorder %s23, 0
      %p213 = por %p211, %p212
      %p214 = scmp.ne.s32.totalorder %s206, %s208
      %p215 = scmp.eq.s32.totalorder %s28, 3
      %p216 = por %p214, %p215
      %p217 = scmp.ne.s32.totalorder %s208, %s209
      %p218 = scmp.eq.s32.totalorder %s28, 0
      %p219 = por %p217, %p218
      %p220 = scmp.ne.s32.totalorder %s208, %s209
      %p221 = scmp.eq.s32.totalorder %s29, 3
      %p222 = por %p220, %p221
      %p224 = scmp.ne.s32.totalorder %s209, %s223
      %p225 = scmp.eq.s32.totalorder %s29, 0
      %p226 = por %p224, %p225
      %s228 = sadd.s32 %s227, 1
      %p231 = scmp.eq.s32.totalorder %s23, 3
      %p232 = scmp.ne.s32.totalorder %s227, %s229
      %p233 = scmp.eq.s32.totalorder %s23, 0
      %p234 = por %p232, %p233
      %p235 = scmp.ne.s32.totalorder %s227, %s229
      %p236 = scmp.eq.s32.totalorder %s28, 3
      %p237 = por %p235, %p236
      %p238 = scmp.ne.s32.totalorder %s229, %s230
      %p239 = scmp.eq.s32.totalorder %s28, 0
      %p240 = por %p238, %p239
      %p241 = scmp.ne.s32.totalorder %s229, %s230
      %p242 = scmp.eq.s32.totalorder %s29, 3
      %p243 = por %p241, %p242
      %p245 = scmp.ne.s32.totalorder %s230, %s244
      %p246 = scmp.eq.s32.totalorder %s29, 0
      %p247 = por %p245, %p246
      %s248 = ssub.s32 %s30, %s42
      %s249 = ssub.s32 %s31, %s38
      %s250 = sor.u32 %s248, %s249
      %p251 = scmp.eq.s32.totalorder %s250, 0
      %s253 = sadd.s32 %s252, 1
      %s254 = scalar_select %p251, %s252, %s253
      %p257 = pneg %p251
      %p258 = scmp.eq.s32.totalorder %s23, 3
      %p259 = por %p257, %p258
      %p260 = scmp.ne.s32.totalorder %s252, %s255
      %p261 = scmp.eq.s32.totalorder %s23, 0
      %p262 = por %p260, %p261
      %p263 = scmp.ne.s32.totalorder %s252, %s255
      %p264 = scmp.eq.s32.totalorder %s28, 3
      %p265 = por %p263, %p264
      %p266 = scmp.ne.s32.totalorder %s255, %s256
      %p267 = scmp.eq.s32.totalorder %s28, 0
      %p268 = por %p266, %p267
      %p269 = scmp.ne.s32.totalorder %s255, %s256
      %p270 = scmp.eq.s32.totalorder %s29, 3
      %p271 = por %p269, %p270
      %p273 = scmp.ne.s32.totalorder %s256, %s272
      %p274 = scmp.eq.s32.totalorder %s29, 0
      %p275 = por %p273, %p274
      %p276 = scmp.le.s32.totalorder 1, %s23
      %p277 = scmp.lt.s32.totalorder %s23, 5
      %p278 = pnand %p276, %p277
      %p279 = pneg %p278
      // Predicated region
      $region9: #{tpu_custom_call.1} parent=5 // pred_check
        _
      $region10: #{tpu_custom_call.1} parent=5 // pred_check_branch
        %281 = sbr.rel (%p278) target = $region12
      $region11: #{tpu_custom_call.1} parent=5 // pred_region
        %s282 = ssub.s32 %s23, 1
        // Predicated region
        $region13: #{tpu_custom_call.1} parent=11 // pred_check
          %p283 = pneg %p156
        $region14: #{tpu_custom_call.1} parent=11 // pred_check_branch
          %285 = sbr.rel (%p283) target = $region16
        $region15: #{tpu_custom_call.1} parent=11 // pred_region
          _
        $region16: #{tpu_custom_call.1} parent=11 // pred_fallthru
          _
        // Predicated region
        $region17: #{tpu_custom_call.1} parent=11 // pred_check
          %p286 = pneg %p177
        $region18: #{tpu_custom_call.1} parent=11 // pred_check_branch
          %288 = sbr.rel (%p286) target = $region20
        $region19: #{tpu_custom_call.1} parent=11 // pred_region
          _
        $region20: #{tpu_custom_call.1} parent=11 // pred_fallthru
          _
        // Predicated region
        $region21: #{tpu_custom_call.1} parent=11 // pred_check
          %p289 = pneg %p198
        $region22: #{tpu_custom_call.1} parent=11 // pred_check_branch
          %291 = sbr.rel (%p289) target = $region24
        $region23: #{tpu_custom_call.1} parent=11 // pred_region
          _
        $region24: #{tpu_custom_call.1} parent=11 // pred_fallthru
          _
        // Predicated region
        $region25: #{tpu_custom_call.1} parent=11 // pred_check
          %p292 = pneg %p219
        $region26: #{tpu_custom_call.1} parent=11 // pred_check_branch
          %294 = sbr.rel (%p292) target = $region28
        $region27: #{tpu_custom_call.1} parent=11 // pred_region
          _
        $region28: #{tpu_custom_call.1} parent=11 // pred_fallthru
          _
        // Predicated region
        $region29: #{tpu_custom_call.1} parent=11 // pred_check
          %p295 = pneg %p240
        $region30: #{tpu_custom_call.1} parent=11 // pred_check_branch
          %297 = sbr.rel (%p295) target = $region32
        $region31: #{tpu_custom_call.1} parent=11 // pred_region
          _
        $region32: #{tpu_custom_call.1} parent=11 // pred_fallthru
          _
      $region12: #{tpu_custom_call.1} parent=5 // pred_fallthru
        _
      %p298 = scmp.lt.s32.totalorder %s23, 4
      // Predicated region
      $region33: #{tpu_custom_call.1} parent=5 // pred_check
        %p299 = pneg %p298
      $region34: #{tpu_custom_call.1} parent=5 // pred_check_branch
        %301 = sbr.rel (%p299) target = $region36
      $region35: #{tpu_custom_call.1} parent=5 // pred_region
        // Predicated region
        $region37: #{tpu_custom_call.1} parent=35 // pred_check
          %p302 = pneg %p57
        $region38: #{tpu_custom_call.1} parent=35 // pred_check_branch
          %304 = sbr.rel (%p302) target = $region40
        $region39: #{tpu_custom_call.1} parent=35 // pred_region
          %s305 = sand.u32 %s47, 1
          %s306 = scalar_lea.sflag [#allocation4], %s305
          %s307 = sand.u32 %s47, 1
          %s308 = smul.addr %s307, 256
          %s309 = scalar_lea.vmem [#allocation3], %s308
          %s310 = smul.u32 8, %s31
          %312 = vsyncadd %s306, 0
          %s313 = smul.addr %s30, 64
          %s314 = sadd.s32 %s310, %s313
          %s315 = smul.addr %s314, 8
          %s316 = scalar_lea.hbm %s0, %s315
          %s317 = sshll.u32 %s316, 4
          %s318 = int_to_ptr.hbm [resolvable:$true] %s317
          %s319 = sshll.u32 %s309, 4
          %s320 = int_to_ptr.vmem [resolvable:$true] %s319
          %325 = dma.hbm_to_vmem [thread:$0]  %s318, 4096, %s320, %s306, 2048, 1024, 64
        $region40: #{tpu_custom_call.1} parent=35 // pred_fallthru
          _
        // Predicated region
        $region41: #{tpu_custom_call.1} parent=35 // pred_check
          %p326 = pneg %p93
        $region42: #{tpu_custom_call.1} parent=35 // pred_check_branch
          %328 = sbr.rel (%p326) target = $region44
        $region43: #{tpu_custom_call.1} parent=35 // pred_region
          %s329 = sand.u32 %s23, 1
          %s330 = scalar_lea.sflag [#allocation7], %s329
          %s331 = sand.u32 %s83, 1
          %s332 = smul.addr %s331, 32
          %s333 = scalar_lea.vmem [#allocation6], %s332
          %s334 = smul.u32 %s31, 8
          %s335 = ssub.s32 %s334, 1
          %p336 = scmp.gt.s32.totalorder %s335, 0
          %s337 = scalar_select %p336, %s335, 0
          %339 = vsyncadd %s330, 0
          %s340 = smul.addr %s30, 64
          %s341 = sadd.s32 %s337, %s340
          %s342 = smul.addr %s341, 8
          %s343 = scalar_lea.hbm %s1, %s342
          %s344 = sshll.u32 %s343, 4
          %s345 = int_to_ptr.hbm [resolvable:$true] %s344
          %s346 = sshll.u32 %s333, 4
          %s347 = int_to_ptr.vmem [resolvable:$true] %s346
          %352 = dma.hbm_to_vmem [thread:$0]  %s345, 512, %s347, %s330, 2048, 128, 8
        $region44: #{tpu_custom_call.1} parent=35 // pred_fallthru
          _
        // Predicated region
        $region45: #{tpu_custom_call.1} parent=35 // pred_check
          %p353 = pneg %p129
        $region46: #{tpu_custom_call.1} parent=35 // pred_check_branch
          %355 = sbr.rel (%p353) target = $region48
        $region47: #{tpu_custom_call.1} parent=35 // pred_region
          %s356 = sand.u32 %s23, 1
          %s357 = scalar_lea.sflag [#allocation7], %s356
          %s358 = sand.u32 %s119, 1
          %s359 = smul.addr %s358, 32
          %s360 = scalar_lea.vmem [#allocation8], %s359
          %s361 = sadd.s32 %s31, 1
          %s362 = smul.u32 %s361, 8
          %p363 = scmp.lt.s32.totalorder %s362, 15
          %s364 = scalar_select %p363, %s362, 15
          %366 = vsyncadd %s357, 0
          %s367 = smul.addr %s30, 64
          %s368 = sadd.s32 %s364, %s367
          %s369 = smul.addr %s368, 8
          %s370 = scalar_lea.hbm %s2, %s369
          %s371 = sshll.u32 %s370, 4
          %s372 = int_to_ptr.hbm [resolvable:$true] %s371
          %s373 = sshll.u32 %s360, 4
          %s374 = int_to_ptr.vmem [resolvable:$true] %s373
          %379 = dma.hbm_to_vmem [thread:$0]  %s372, 512, %s374, %s357, 2048, 128, 8
        $region48: #{tpu_custom_call.1} parent=35 // pred_fallthru
          _
      $region36: #{tpu_custom_call.1} parent=5 // pred_fallthru
        _
      %p380 = scmp.le.s32.totalorder 1, %s23
      %p381 = scmp.lt.s32.totalorder %s23, 5
      %p382 = pnand %p380, %p381
      %p383 = pneg %p382
      // Predicated region
      $region49: #{tpu_custom_call.1} parent=5 // pred_check
        _
      $region50: #{tpu_custom_call.1} parent=5 // pred_check_branch
        %385 = sbr.rel (%p382) target = $region52
      $region51: #{tpu_custom_call.1} parent=5 // pred_region
        %s386 = ssub.s32 %s23, 1
        %s387 = sand.u32 %s50, 1
        %s388 = scalar_lea.sflag [#allocation4], %s387
        %s389 = sand.u32 %s50, 1
        %s390 = smul.addr %s389, 256
        %s391 = scalar_lea.vmem [#allocation3], %s390
        // Predicated region
        $region53: #{tpu_custom_call.1} parent=51 // pred_check
          %p392 = pneg %p63
        $region54: #{tpu_custom_call.1} parent=51 // pred_check_branch
          %394 = sbr.rel (%p392) target = $region56
        $region55: #{tpu_custom_call.1} parent=51 // pred_region
          %396 = dma.done %s388, 4096
        $region56: #{tpu_custom_call.1} parent=51 // pred_fallthru
          _
        %s397 = sand.u32 %s28, 1
        %s398 = scalar_lea.sflag [#allocation7], %s397
        %s399 = sand.u32 %s86, 1
        %s400 = smul.addr %s399, 32
        %s401 = scalar_lea.vmem [#allocation6], %s400
        // Predicated region
        $region57: #{tpu_custom_call.1} parent=51 // pred_check
          %p402 = pneg %p99
        $region58: #{tpu_custom_call.1} parent=51 // pred_check_branch
          %404 = sbr.rel (%p402) target = $region60
        $region59: #{tpu_custom_call.1} parent=51 // pred_region
          %406 = dma.done %s398, 512
        $region60: #{tpu_custom_call.1} parent=51 // pred_fallthru
          _
        %s407 = sand.u32 %s28, 1
        %s408 = scalar_lea.sflag [#allocation7], %s407
        %s409 = sand.u32 %s122, 1
        %s410 = smul.addr %s409, 32
        %s411 = scalar_lea.vmem [#allocation8], %s410
        // Predicated region
        $region61: #{tpu_custom_call.1} parent=51 // pred_check
          %p412 = pneg %p135
        $region62: #{tpu_custom_call.1} parent=51 // pred_check_branch
          %414 = sbr.rel (%p412) target = $region64
        $region63: #{tpu_custom_call.1} parent=51 // pred_region
          %416 = dma.done %s408, 512
        $region64: #{tpu_custom_call.1} parent=51 // pred_fallthru
          _
        %s417 = sand.u32 %s50, 1
        %s418 = scalar_lea.sflag [#allocation4], %s417
        %s419 = sand.u32 %s50, 1
        %s420 = smul.addr %s419, 256
        %s421 = scalar_lea.vmem [#allocation3], %s420
        %p422 = pneg %p63
        %p423 = pneg %p60
        %s424 = sand.u32 %s28, 1
        %s425 = scalar_lea.sflag [#allocation7], %s424
        %s426 = sand.u32 %s86, 1
        %s427 = smul.addr %s426, 32
        %s428 = scalar_lea.vmem [#allocation6], %s427
        %p429 = pneg %p99
        %p430 = pneg %p96
        %s431 = sand.u32 %s28, 1
        %s432 = scalar_lea.sflag [#allocation7], %s431
        %s433 = sand.u32 %s122, 1
        %s434 = smul.addr %s433, 32
        %s435 = scalar_lea.vmem [#allocation8], %s434
        %p436 = pneg %p135
        %p437 = pneg %p132
        %p438 = pneg %p156
        %p439 = pneg %p153
        %p440 = pneg %p177
        %p441 = pneg %p174
        %p442 = pneg %p198
        %p443 = pneg %p195
        %p444 = pneg %p219
        %p445 = pneg %p216
        %p446 = pneg %p240
        %p447 = pneg %p237
        %p448 = pneg %p268
        %p449 = pneg %p265
        %s450 = sand.u32 %s255, 1
        %s451 = scalar_lea.sflag [#allocation5], %s450
        %s452 = sand.u32 %s255, 1
        %s453 = smul.addr %s452, 256
        %s454 = scalar_lea.vmem [#allocation9], %s453
        %s455 = smul.u32 8, %s33
        %s456 = smul.u32 %s33, 8
        %s457 = ssub.s32 %s456, 1
        %p458 = scmp.gt.s32.totalorder %s457, 0
        %s459 = scalar_select %p458, %s457, 0
        %s460 = sadd.s32 %s33, 1
        %s461 = smul.u32 %s460, 8
        %p462 = scmp.lt.s32.totalorder %s461, 15
        %s463 = scalar_select %p462, %s461, 15
        %s464 = smul.u32 8, %s33
        %v465 = vld [vmem:[%s6] sm:$0xff]
        %v466 = vld [vmem:[%s7] sm:$0xff]
        %v467 = vld [vmem:[%s7 + $0x8] sm:$0xff]
        %v468 = vld [vmem:[%s7 + $0x10] sm:$0xff]
        %v469 = vld [vmem:[%s7 + $0x18] sm:$0xff]
        %v470 = vld [vmem:[%s391] sm:$0xff]
        %v471 = vld [vmem:[%s391 + $0x8] sm:$0xff]
        %v472 = vld [vmem:[%s391 + $0x10] sm:$0xff]
        %v473 = vld [vmem:[%s391 + $0x18] sm:$0xff]
        %v474 = vld [vmem:[%s391 + $0x20] sm:$0xff]
        %v475 = vld [vmem:[%s391 + $0x28] sm:$0xff]
        %v476 = vld [vmem:[%s391 + $0x30] sm:$0xff]
        %v477 = vld [vmem:[%s391 + $0x38] sm:$0xff]
        %v478 = vld [vmem:[%s391 + $0x40] sm:$0xff]
        %v479 = vld [vmem:[%s391 + $0x48] sm:$0xff]
        %v480 = vld [vmem:[%s391 + $0x50] sm:$0xff]
        %v481 = vld [vmem:[%s391 + $0x58] sm:$0xff]
        %v482 = vld [vmem:[%s391 + $0x60] sm:$0xff]
        %v483 = vld [vmem:[%s391 + $0x68] sm:$0xff]
        %v484 = vld [vmem:[%s391 + $0x70] sm:$0xff]
        %v485 = vld [vmem:[%s391 + $0x78] sm:$0xff]
        %v486 = vld [vmem:[%s391 + $0x80] sm:$0xff]
        %v487 = vld [vmem:[%s391 + $0x88] sm:$0xff]
        %v488 = vld [vmem:[%s391 + $0x90] sm:$0xff]
        %v489 = vld [vmem:[%s391 + $0x98] sm:$0xff]
        %v490 = vld [vmem:[%s391 + $0xa0] sm:$0xff]
        %v491 = vld [vmem:[%s391 + $0xa8] sm:$0xff]
        %v492 = vld [vmem:[%s391 + $0xb0] sm:$0xff]
        %v493 = vld [vmem:[%s391 + $0xb8] sm:$0xff]
        %v494 = vld [vmem:[%s391 + $0xc0] sm:$0xff]
        %v495 = vld [vmem:[%s391 + $0xc8] sm:$0xff]
        %v496 = vld [vmem:[%s391 + $0xd0] sm:$0xff]
        %v497 = vld [vmem:[%s391 + $0xd8] sm:$0xff]
        %v498 = vld [vmem:[%s391 + $0xe0] sm:$0xff]
        %v499 = vld [vmem:[%s391 + $0xe8] sm:$0xff]
        %v500 = vld [vmem:[%s391 + $0xf0] sm:$0xff]
        %v501 = vld [vmem:[%s391 + $0xf8] sm:$0xff]
        %v502 = vld [vmem:[%s3] sm:$0xff]
        %504 = vset.pattern.permute.xlu0 0
        %505 = vperm.xlu0 %504, %v465
        %v506 = vpop.permute.xlu0 %505
        %vm508 = vcmask 261120
        %v510 = vsel %vm508, %v502, 0
        %512 = vmatpush.msra.mxu0 0.0
        %513 = vmatpush.msra.mxu0 0.0
        %514 = vmatpush.msra.mxu0 0.0
        %515 = vmatpush.msra.mxu0 0.0
        %516 = vmatpush.msra.mxu0 0.0
        %517 = vmatpush.msra.mxu0 0.0
        %518 = vmatpush.msra.mxu0 0.0
        %519 = vmatpush.msra.mxu0 0.0
        %520 = vmatpush.msra.mxu0 0.0
        %521 = vmatpush.msra.mxu0 0.0
        %522 = vmatpush.msra.mxu0 0.0
        %523 = vmatpush.msra.mxu0 0.0
        %524 = vmatpush.msra.mxu0 %v494
        %525 = vmatpush.msra.mxu0 %v486
        %526 = vmatpush.msra.mxu0 %v478
        %527 = vmatpush.msra.mxu0 %v470
        %528 = vmatmul.f32.gmra.mxu0 %v510
        %v529 = vpop.f32.mrf.mxu0
        %v530 = vadd.f32 %v506, %v529
        %531 = vdwg.mxu0
        %532 = vmatpush.msra.mxu0 0.0
        %533 = vmatpush.msra.mxu0 0.0
        %534 = vmatpush.msra.mxu0 0.0
        %535 = vmatpush.msra.mxu0 0.0
        %536 = vmatpush.msra.mxu0 0.0
        %537 = vmatpush.msra.mxu0 0.0
        %538 = vmatpush.msra.mxu0 0.0
        %539 = vmatpush.msra.mxu0 0.0
        %540 = vmatpush.msra.mxu0 0.0
        %541 = vmatpush.msra.mxu0 0.0
        %542 = vmatpush.msra.mxu0 0.0
        %543 = vmatpush.msra.mxu0 0.0
        %544 = vmatpush.msra.mxu0 %v495
        %545 = vmatpush.msra.mxu0 %v487
        %546 = vmatpush.msra.mxu0 %v479
        %547 = vmatpush.msra.mxu0 %v471
        %548 = vmatmul.f32.gmra.mxu0 %v510
        %v549 = vpop.f32.mrf.mxu0
        %v550 = vadd.f32 %v506, %v549
        %551 = vdwg.mxu0
        %552 = vmatpush.msra.mxu0 0.0
        %553 = vmatpush.msra.mxu0 0.0
        %554 = vmatpush.msra.mxu0 0.0
        %555 = vmatpush.msra.mxu0 0.0
        %556 = vmatpush.msra.mxu0 0.0
        %557 = vmatpush.msra.mxu0 0.0
        %558 = vmatpush.msra.mxu0 0.0
        %559 = vmatpush.msra.mxu0 0.0
        %560 = vmatpush.msra.mxu0 0.0
        %561 = vmatpush.msra.mxu0 0.0
        %562 = vmatpush.msra.mxu0 0.0
        %563 = vmatpush.msra.mxu0 0.0
        %564 = vmatpush.msra.mxu0 %v496
        %565 = vmatpush.msra.mxu0 %v488
        %566 = vmatpush.msra.mxu0 %v480
        %567 = vmatpush.msra.mxu0 %v472
        %568 = vmatmul.f32.gmra.mxu0 %v510
        %v569 = vpop.f32.mrf.mxu0
        %v570 = vadd.f32 %v506, %v569
        %571 = vdwg.mxu0
        %572 = vmatpush.msra.mxu0 0.0
        %573 = vmatpush.msra.mxu0 0.0
        %574 = vmatpush.msra.mxu0 0.0
        %575 = vmatpush.msra.mxu0 0.0
        %576 = vmatpush.msra.mxu0 0.0
        %577 = vmatpush.msra.mxu0 0.0
        %578 = vmatpush.msra.mxu0 0.0
        %579 = vmatpush.msra.mxu0 0.0
        %580 = vmatpush.msra.mxu0 0.0
        %581 = vmatpush.msra.mxu0 0.0
        %582 = vmatpush.msra.mxu0 0.0
        %583 = vmatpush.msra.mxu0 0.0
        %584 = vmatpush.msra.mxu0 %v497
        %585 = vmatpush.msra.mxu0 %v489
        %586 = vmatpush.msra.mxu0 %v481
        %587 = vmatpush.msra.mxu0 %v473
        %588 = vmatmul.f32.gmra.mxu0 %v510
        %v589 = vpop.f32.mrf.mxu0
        %v590 = vadd.f32 %v506, %v589
        %591 = vdwg.mxu0
        %592 = vmatpush.msra.mxu0 0.0
        %593 = vmatpush.msra.mxu0 0.0
        %594 = vmatpush.msra.mxu0 0.0
        %595 = vmatpush.msra.mxu0 0.0
        %596 = vmatpush.msra.mxu0 0.0
        %597 = vmatpush.msra.mxu0 0.0
        %598 = vmatpush.msra.mxu0 0.0
        %599 = vmatpush.msra.mxu0 0.0
        %600 = vmatpush.msra.mxu0 0.0
        %601 = vmatpush.msra.mxu0 0.0
        %602 = vmatpush.msra.mxu0 0.0
        %603 = vmatpush.msra.mxu0 0.0
        %604 = vmatpush.msra.mxu0 %v498
        %605 = vmatpush.msra.mxu0 %v490
        %606 = vmatpush.msra.mxu0 %v482
        %607 = vmatpush.msra.mxu0 %v474
        %608 = vmatmul.f32.gmra.mxu0 %v510
        %v609 = vpop.f32.mrf.mxu0
        %v610 = vadd.f32 %v506, %v609
        %611 = vdwg.mxu0
        %612 = vmatpush.msra.mxu0 0.0
        %613 = vmatpush.msra.mxu0 0.0
        %614 = vmatpush.msra.mxu0 0.0
        %615 = vmatpush.msra.mxu0 0.0
        %616 = vmatpush.msra.mxu0 0.0
        %617 = vmatpush.msra.mxu0 0.0
        %618 = vmatpush.msra.mxu0 0.0
        %619 = vmatpush.msra.mxu0 0.0
        %620 = vmatpush.msra.mxu0 0.0
        %621 = vmatpush.msra.mxu0 0.0
        %622 = vmatpush.msra.mxu0 0.0
        %623 = vmatpush.msra.mxu0 0.0
        %624 = vmatpush.msra.mxu0 %v499
        %625 = vmatpush.msra.mxu0 %v491
        %626 = vmatpush.msra.mxu0 %v483
        %627 = vmatpush.msra.mxu0 %v475
        %628 = vmatmul.f32.gmra.mxu0 %v510
        %v629 = vpop.f32.mrf.mxu0
        %v630 = vadd.f32 %v506, %v629
        %631 = vdwg.mxu0
        %632 = vmatpush.msra.mxu0 0.0
        %633 = vmatpush.msra.mxu0 0.0
        %634 = vmatpush.msra.mxu0 0.0
        %635 = vmatpush.msra.mxu0 0.0
        %636 = vmatpush.msra.mxu0 0.0
        %637 = vmatpush.msra.mxu0 0.0
        %638 = vmatpush.msra.mxu0 0.0
        %639 = vmatpush.msra.mxu0 0.0
        %640 = vmatpush.msra.mxu0 0.0
        %641 = vmatpush.msra.mxu0 0.0
        %642 = vmatpush.msra.mxu0 0.0
        %643 = vmatpush.msra.mxu0 0.0
        %644 = vmatpush.msra.mxu0 %v500
        %645 = vmatpush.msra.mxu0 %v492
        %646 = vmatpush.msra.mxu0 %v484
        %647 = vmatpush.msra.mxu0 %v476
        %648 = vmatmul.f32.gmra.mxu0 %v510
        %v649 = vpop.f32.mrf.mxu0
        %v650 = vadd.f32 %v506, %v649
        %651 = vdwg.mxu0
        %652 = vmatpush.msra.mxu0 0.0
        %653 = vmatpush.msra.mxu0 0.0
        %654 = vmatpush.msra.mxu0 0.0
        %655 = vmatpush.msra.mxu0 0.0
        %656 = vmatpush.msra.mxu0 0.0
        %657 = vmatpush.msra.mxu0 0.0
        %658 = vmatpush.msra.mxu0 0.0
        %659 = vmatpush.msra.mxu0 0.0
        %660 = vmatpush.msra.mxu0 0.0
        %661 = vmatpush.msra.mxu0 0.0
        %662 = vmatpush.msra.mxu0 0.0
        %663 = vmatpush.msra.mxu0 0.0
        %664 = vmatpush.msra.mxu0 %v501
        %665 = vmatpush.msra.mxu0 %v493
        %666 = vmatpush.msra.mxu0 %v485
        %667 = vmatpush.msra.mxu0 %v477
        %668 = vmatmul.f32.gmra.mxu0 %v510
        %v669 = vpop.f32.mrf.mxu0
        %v670 = vadd.f32 %v506, %v669
        %671 = vdwg.mxu0
        %v672 = vmax.f32 %v530, 0.0
        %v673 = vmax.f32 %v550, 0.0
        %v674 = vmax.f32 %v570, 0.0
        %v675 = vmax.f32 %v590, 0.0
        %v676 = vmax.f32 %v610, 0.0
        %v677 = vmax.f32 %v630, 0.0
        %v678 = vmax.f32 %v650, 0.0
        %v679 = vmax.f32 %v670, 0.0
        %v680 = vld [vmem:[%s401] sm:$0xff]
        %v681 = vld [vmem:[%s401 + $0x8] sm:$0xff]
        %v682 = vld [vmem:[%s401 + $0x10] sm:$0xff]
        %v683 = vld [vmem:[%s401 + $0x18] sm:$0xff]
        %684 = vmatpush.msra.mxu0 0.0
        %685 = vmatpush.msra.mxu0 0.0
        %686 = vmatpush.msra.mxu0 0.0
        %687 = vmatpush.msra.mxu0 0.0
        %688 = vmatpush.msra.mxu0 0.0
        %689 = vmatpush.msra.mxu0 0.0
        %690 = vmatpush.msra.mxu0 0.0
        %691 = vmatpush.msra.mxu0 0.0
        %692 = vmatpush.msra.mxu0 0.0
        %693 = vmatpush.msra.mxu0 0.0
        %694 = vmatpush.msra.mxu0 0.0
        %695 = vmatpush.msra.mxu0 0.0
        %696 = vmatpush.msra.mxu0 %v683
        %697 = vmatpush.msra.mxu0 %v682
        %698 = vmatpush.msra.mxu0 %v681
        %699 = vmatpush.msra.mxu0 %v680
        %700 = vmatmul.f32.gmra.mxu0 %v510
        %v701 = vpop.f32.mrf.mxu0
        %v702 = vadd.f32 %v506, %v701
        %703 = vdwg.mxu0
        %v704 = vmax.f32 %v702, 0.0
        %v705 = vld [vmem:[%s411] sm:$0xff]
        %v706 = vld [vmem:[%s411 + $0x8] sm:$0xff]
        %v707 = vld [vmem:[%s411 + $0x10] sm:$0xff]
        %v708 = vld [vmem:[%s411 + $0x18] sm:$0xff]
        %709 = vmatpush.msra.mxu0 0.0
        %710 = vmatpush.msra.mxu0 0.0
        %711 = vmatpush.msra.mxu0 0.0
        %712 = vmatpush.msra.mxu0 0.0
        %713 = vmatpush.msra.mxu0 0.0
        %714 = vmatpush.msra.mxu0 0.0
        %715 = vmatpush.msra.mxu0 0.0
        %716 = vmatpush.msra.mxu0 0.0
        %717 = vmatpush.msra.mxu0 0.0
        %718 = vmatpush.msra.mxu0 0.0
        %719 = vmatpush.msra.mxu0 0.0
        %720 = vmatpush.msra.mxu0 0.0
        %721 = vmatpush.msra.mxu0 %v708
        %722 = vmatpush.msra.mxu0 %v707
        %723 = vmatpush.msra.mxu0 %v706
        %724 = vmatpush.msra.mxu0 %v705
        %725 = vmatmul.f32.gmra.mxu0 %v510
        %v726 = vpop.f32.mrf.mxu0
        %v727 = vadd.f32 %v506, %v726
        %728 = vdwg.mxu0
        %v729 = vmax.f32 %v727, 0.0
        %p730 = scmp.gt.s32.totalorder %s33, 0
        %s731 = scalar_select %p730, 1, 0
        %v732 = vstv %s731
        %vm733 = vcmp.eq.s32.totalorder %v732, 1
        %v734 = vsel %vm733, %v704, 0.0
        %p735 = scmp.lt.s32.totalorder %s33, 1
        %s736 = scalar_select %p735, 1, 0
        %v737 = vstv %s736
        %vm738 = vcmp.eq.s32.totalorder %v737, 1
        %v739 = vsel %vm738, %v729, 0.0
        %v740 = vlaneseq
        %v741 = vand.u32 %v740, 127
        %vm742 = vcmp.lt.s32.totalorder %v741, 127
        %v743 = vsel %vm742, 1, 0
        %v744 = vcvt.s32.f32 %v743
        %vm745 = vcmp.gt.s32.totalorder %v741, 0
        %v746 = vsel %vm745, 1, 0
        %v747 = vcvt.s32.f32 %v746
        %v748 = vadd.s32 %v741, 128
        %v749 = vadd.s32 %v741, 256
        %v750 = vadd.s32 %v741, 384
        %v751 = vadd.s32 %v741, 512
        %v752 = vadd.s32 %v741, 640
        %v753 = vadd.s32 %v741, 768
        %v754 = vadd.s32 %v741, 896
        %v755 = vcvt.s32.f32 %v741
        %v756 = vcvt.s32.f32 %v748
        %v757 = vcvt.s32.f32 %v749
        %v758 = vcvt.s32.f32 %v750
        %v759 = vcvt.s32.f32 %v751
        %v760 = vcvt.s32.f32 %v752
        %v761 = vcvt.s32.f32 %v753
        %v762 = vcvt.s32.f32 %v754
        %v763 = vrcp.pop 128.0
        %v764 = vmul.f32 128.0, %v763
        %v765 = vsub.f32 1.0, %v764
        %v766 = vmul.f32 %v763, %v765
        %v767 = vadd.f32 %v763, %v766
        %vm768 = vweird.f32 %v763
        %v769 = vsel %vm768, %v763, %v767
        %v770 = vmul.f32 %v755, %v769
        %v771 = vmul.f32 %v756, %v769
        %v772 = vmul.f32 %v757, %v769
        %v773 = vmul.f32 %v758, %v769
        %v774 = vmul.f32 %v759, %v769
        %v775 = vmul.f32 %v760, %v769
        %v776 = vmul.f32 %v761, %v769
        %v777 = vmul.f32 %v762, %v769
        %v778 = vfloor.f32 %v770
        %v779 = vfloor.f32 %v771
        %v780 = vfloor.f32 %v772
        %v781 = vfloor.f32 %v773
        %v782 = vfloor.f32 %v774
        %v783 = vfloor.f32 %v775
        %v784 = vfloor.f32 %v776
        %v785 = vfloor.f32 %v777
        %v786 = vmul.f32 %v778, 128.0
        %v787 = vmul.f32 %v779, 128.0
        %v788 = vmul.f32 %v780, 128.0
        %v789 = vmul.f32 %v781, 128.0
        %v790 = vmul.f32 %v782, 128.0
        %v791 = vmul.f32 %v783, 128.0
        %v792 = vmul.f32 %v784, 128.0
        %v793 = vmul.f32 %v785, 128.0
        %v794 = vsub.f32 %v755, %v786
        %v795 = vsub.f32 %v756, %v787
        %v796 = vsub.f32 %v757, %v788
        %v797 = vsub.f32 %v758, %v789
        %v798 = vsub.f32 %v759, %v790
        %v799 = vsub.f32 %v760, %v791
        %v800 = vsub.f32 %v761, %v792
        %v801 = vsub.f32 %v762, %v793
        %vm802 = vcmp.lt.f32.partialorder %v794, 126.5
        %vm803 = vcmp.lt.f32.partialorder %v795, 126.5
        %vm804 = vcmp.lt.f32.partialorder %v796, 126.5
        %vm805 = vcmp.lt.f32.partialorder %v797, 126.5
        %vm806 = vcmp.lt.f32.partialorder %v798, 126.5
        %vm807 = vcmp.lt.f32.partialorder %v799, 126.5
        %vm808 = vcmp.lt.f32.partialorder %v800, 126.5
        %vm809 = vcmp.lt.f32.partialorder %v801, 126.5
        %v810 = vsel %vm802, 1, 0
        %v811 = vsel %vm803, 1, 0
        %v812 = vsel %vm804, 1, 0
        %v813 = vsel %vm805, 1, 0
        %v814 = vsel %vm806, 1, 0
        %v815 = vsel %vm807, 1, 0
        %v816 = vsel %vm808, 1, 0
        %v817 = vsel %vm809, 1, 0
        %v818 = vcvt.s32.f32 %v810
        %v819 = vcvt.s32.f32 %v811
        %v820 = vcvt.s32.f32 %v812
        %v821 = vcvt.s32.f32 %v813
        %v822 = vcvt.s32.f32 %v814
        %v823 = vcvt.s32.f32 %v815
        %v824 = vcvt.s32.f32 %v816
        %v825 = vcvt.s32.f32 %v817
        %vm826 = vcmp.gt.f32.partialorder %v794, 0.5
        %vm827 = vcmp.gt.f32.partialorder %v795, 0.5
        %vm828 = vcmp.gt.f32.partialorder %v796, 0.5
        %vm829 = vcmp.gt.f32.partialorder %v797, 0.5
        %vm830 = vcmp.gt.f32.partialorder %v798, 0.5
        %vm831 = vcmp.gt.f32.partialorder %v799, 0.5
        %vm832 = vcmp.gt.f32.partialorder %v800, 0.5
        %vm833 = vcmp.gt.f32.partialorder %v801, 0.5
        %v834 = vsel %vm826, 1, 0
        %v835 = vsel %vm827, 1, 0
        %v836 = vsel %vm828, 1, 0
        %v837 = vsel %vm829, 1, 0
        %v838 = vsel %vm830, 1, 0
        %v839 = vsel %vm831, 1, 0
        %v840 = vsel %vm832, 1, 0
        %v841 = vsel %vm833, 1, 0
        %v842 = vcvt.s32.f32 %v834
        %v843 = vcvt.s32.f32 %v835
        %v844 = vcvt.s32.f32 %v836
        %v845 = vcvt.s32.f32 %v837
        %v846 = vcvt.s32.f32 %v838
        %v847 = vcvt.s32.f32 %v839
        %v848 = vcvt.s32.f32 %v840
        %v849 = vcvt.s32.f32 %v841
        %vm850 = vcmask 7168
        %851 = vst.msk [vmem:[#allocation2 + $0x8] sm:$0xff] %vm850, 0.0
        %vm852 = vcmask 1048568
        %853 = vst.msk [vmem:[#allocation2 + $0x110] sm:$0xff] %vm852, 0.0
        %854 = vst [vmem:[#allocation2 + $0x68] sm:$0xff] %v734
        %855 = vst [vmem:[#allocation2 + $0x70] sm:$0xff] %v672
        %856 = vst [vmem:[#allocation2 + $0x78] sm:$0xff] %v673
        %857 = vst [vmem:[#allocation2 + $0x80] sm:$0xff] %v674
        %858 = vst [vmem:[#allocation2 + $0x88] sm:$0xff] %v675
        %859 = vst [vmem:[#allocation2 + $0x90] sm:$0xff] %v676
        %860 = vst [vmem:[#allocation2 + $0x98] sm:$0xff] %v677
        %861 = vst [vmem:[#allocation2 + $0xa0] sm:$0xff] %v678
        %862 = vst [vmem:[#allocation2 + $0xa8] sm:$0xff] %v679
        %863 = vst [vmem:[#allocation2 + $0xb0] sm:$0xff] %v739
        %v864 = vmul.f32 %v734, %v744
        %866 = vrot.lane.b32.xlu0 %v864, 1
        %v867 = vpop.permute.xlu0 %866
        %vm869 = vcmask 1047560
        %870 = vst.msk [vmem:[#allocation2 + $0x8] sm:$0xff] %vm869, %v867
        %871 = vst.msk [vmem:[#allocation2 + $0x10] sm:$0xff] %vm850, %v867
        %v872 = vmul.f32 %v672, %v818
        %v873 = vmul.f32 %v673, %v819
        %v874 = vmul.f32 %v674, %v820
        %v875 = vmul.f32 %v675, %v821
        %v876 = vmul.f32 %v676, %v822
        %v877 = vmul.f32 %v677, %v823
        %v878 = vmul.f32 %v678, %v824
        %v879 = vmul.f32 %v679, %v825
        %888 = vrot.lane.b32.xlu0 %v872, 1
        %v889 = vpop.permute.xlu0 %888
        %890 = vrot.lane.b32.xlu0 %v873, 1
        %v891 = vpop.permute.xlu0 %890
        %892 = vrot.lane.b32.xlu0 %v874, 1
        %v893 = vpop.permute.xlu0 %892
        %894 = vrot.lane.b32.xlu0 %v875, 1
        %v895 = vpop.permute.xlu0 %894
        %896 = vrot.lane.b32.xlu0 %v876, 1
        %v897 = vpop.permute.xlu0 %896
        %898 = vrot.lane.b32.xlu0 %v877, 1
        %v899 = vpop.permute.xlu0 %898
        %900 = vrot.lane.b32.xlu0 %v878, 1
        %v901 = vpop.permute.xlu0 %900
        %902 = vrot.lane.b32.xlu0 %v879, 1
        %v903 = vpop.permute.xlu0 %902
        %v904 = vsel %vm850, %v889, %v891
        %v905 = vsel %vm850, %v891, %v893
        %v906 = vsel %vm850, %v893, %v895
        %v907 = vsel %vm850, %v895, %v897
        %v908 = vsel %vm850, %v897, %v899
        %v909 = vsel %vm850, %v899, %v901
        %v910 = vsel %vm850, %v901, %v903
        %920 = vst.msk [vmem:[#allocation2 + $0x10] sm:$0xff] %vm869, %v889
        %921 = vst [vmem:[#allocation2 + $0x18] sm:$0xff] %v904
        %922 = vst [vmem:[#allocation2 + $0x20] sm:$0xff] %v905
        %923 = vst [vmem:[#allocation2 + $0x28] sm:$0xff] %v906
        %924 = vst [vmem:[#allocation2 + $0x30] sm:$0xff] %v907
        %925 = vst [vmem:[#allocation2 + $0x38] sm:$0xff] %v908
        %926 = vst [vmem:[#allocation2 + $0x40] sm:$0xff] %v909
        %927 = vst [vmem:[#allocation2 + $0x48] sm:$0xff] %v910
        %928 = vst.msk [vmem:[#allocation2 + $0x50] sm:$0xff] %vm850, %v903
        %v929 = vmul.f32 %v739, %v744
        %931 = vrot.lane.b32.xlu0 %v929, 1
        %v932 = vpop.permute.xlu0 %931
        %934 = vst.msk [vmem:[#allocation2 + $0x50] sm:$0xff] %vm869, %v932
        %935 = vst.msk [vmem:[#allocation2 + $0x58] sm:$0xff] %vm850, %v932
        %v936 = vmul.f32 %v734, %v747
        %938 = vrot.lane.b32.xlu0 %v936, 127
        %v939 = vpop.permute.xlu0 %938
        %941 = vst.msk [vmem:[#allocation2 + $0xc0] sm:$0xff] %vm852, %v939
        %vm942 = vcmask 1039360
        %943 = vst.msk [vmem:[#allocation2 + $0xc8] sm:$0xff] %vm942, %v939
        %v944 = vmul.f32 %v672, %v842
        %v945 = vmul.f32 %v673, %v843
        %v946 = vmul.f32 %v674, %v844
        %v947 = vmul.f32 %v675, %v845
        %v948 = vmul.f32 %v676, %v846
        %v949 = vmul.f32 %v677, %v847
        %v950 = vmul.f32 %v678, %v848
        %v951 = vmul.f32 %v679, %v849
        %960 = vrot.lane.b32.xlu0 %v944, 127
        %v961 = vpop.permute.xlu0 %960
        %962 = vrot.lane.b32.xlu0 %v945, 127
        %v963 = vpop.permute.xlu0 %962
        %964 = vrot.lane.b32.xlu0 %v946, 127
        %v965 = vpop.permute.xlu0 %964
        %966 = vrot.lane.b32.xlu0 %v947, 127
        %v967 = vpop.permute.xlu0 %966
        %968 = vrot.lane.b32.xlu0 %v948, 127
        %v969 = vpop.permute.xlu0 %968
        %970 = vrot.lane.b32.xlu0 %v949, 127
        %v971 = vpop.permute.xlu0 %970
        %972 = vrot.lane.b32.xlu0 %v950, 127
        %v973 = vpop.permute.xlu0 %972
        %974 = vrot.lane.b32.xlu0 %v951, 127
        %v975 = vpop.permute.xlu0 %974
        %v976 = vsel %vm942, %v961, %v963
        %v977 = vsel %vm942, %v963, %v965
        %v978 = vsel %vm942, %v965, %v967
        %v979 = vsel %vm942, %v967, %v969
        %v980 = vsel %vm942, %v969, %v971
        %v981 = vsel %vm942, %v971, %v973
        %v982 = vsel %vm942, %v973, %v975
        %992 = vst.msk [vmem:[#allocation2 + $0xc8] sm:$0xff] %vm852, %v961
        %993 = vst [vmem:[#allocation2 + $0xd0] sm:$0xff] %v976
        %994 = vst [vmem:[#allocation2 + $0xd8] sm:$0xff] %v977
        %995 = vst [vmem:[#allocation2 + $0xe0] sm:$0xff] %v978
        %996 = vst [vmem:[#allocation2 + $0xe8] sm:$0xff] %v979
        %997 = vst [vmem:[#allocation2 + $0xf0] sm:$0xff] %v980
        %998 = vst [vmem:[#allocation2 + $0xf8] sm:$0xff] %v981
        %999 = vst [vmem:[#allocation2 + $0x100] sm:$0xff] %v982
        %1000 = vst.msk [vmem:[#allocation2 + $0x108] sm:$0xff] %vm942, %v975
        %v1001 = vmul.f32 %v739, %v747
        %1003 = vrot.lane.b32.xlu0 %v1001, 127
        %v1004 = vpop.permute.xlu0 %1003
        %1006 = vst.msk [vmem:[#allocation2 + $0x108] sm:$0xff] %vm852, %v1004
        %1007 = vst.msk [vmem:[#allocation2 + $0x110] sm:$0xff] %vm942, %v1004
        %v1008 = vld [vmem:[%s4] sm:$0xff]
        %v1009 = vld [vmem:[#allocation2 + $0x8] sm:$0xff]
        %v1010 = vld [vmem:[#allocation2 + $0x10] sm:$0xff]
        %v1011 = vld [vmem:[#allocation2 + $0x18] sm:$0xff]
        %v1012 = vld [vmem:[#allocation2 + $0x20] sm:$0xff]
        %v1013 = vld [vmem:[#allocation2 + $0x28] sm:$0xff]
        %v1014 = vld [vmem:[#allocation2 + $0x30] sm:$0xff]
        %v1015 = vld [vmem:[#allocation2 + $0x38] sm:$0xff]
        %v1016 = vld [vmem:[#allocation2 + $0x40] sm:$0xff]
        %v1017 = vld [vmem:[#allocation2 + $0x68] sm:$0xff]
        %v1018 = vld [vmem:[#allocation2 + $0x70] sm:$0xff]
        %v1019 = vld [vmem:[#allocation2 + $0x78] sm:$0xff]
        %v1020 = vld [vmem:[#allocation2 + $0x80] sm:$0xff]
        %v1021 = vld [vmem:[#allocation2 + $0x88] sm:$0xff]
        %v1022 = vld [vmem:[#allocation2 + $0x90] sm:$0xff]
        %v1023 = vld [vmem:[#allocation2 + $0x98] sm:$0xff]
        %v1024 = vld [vmem:[#allocation2 + $0xa0] sm:$0xff]
        %v1025 = vld [vmem:[#allocation2 + $0xc8] sm:$0xff]
        %v1026 = vld [vmem:[#allocation2 + $0xd0] sm:$0xff]
        %v1027 = vld [vmem:[#allocation2 + $0xd8] sm:$0xff]
        %v1028 = vld [vmem:[#allocation2 + $0xe0] sm:$0xff]
        %v1029 = vld [vmem:[#allocation2 + $0xe8] sm:$0xff]
        %v1030 = vld [vmem:[#allocation2 + $0xf0] sm:$0xff]
        %v1031 = vld [vmem:[#allocation2 + $0xf8] sm:$0xff]
        %v1032 = vld [vmem:[#allocation2 + $0x100] sm:$0xff]
        %s1033 = scalar_lea.vmem %s4, 8
        %v1034 = vld [vmem:[%s1033] sm:$0xff]
        %v1035 = vld [vmem:[#allocation2 + $0x48] sm:$0xff]
        %v1036 = vld [vmem:[#allocation2 + $0xa8] sm:$0xff]
        %v1037 = vld [vmem:[#allocation2 + $0x108] sm:$0xff]
        %vm1038 = vcmask 195584
        %v1040 = vsel %vm1038, %v1034, 0
        %1042 = vmatpush.msra.mxu0 0.0
        %1043 = vmatpush.msra.mxu0 0.0
        %1044 = vmatpush.msra.mxu0 0.0
        %1045 = vmatpush.msra.mxu0 0.0
        %1046 = vmatpush.msra.mxu0 0.0
        %1047 = vmatpush.msra.mxu0 0.0
        %1048 = vmatpush.msra.mxu0 0.0
        %1049 = vmatpush.msra.mxu0 0.0
        %1050 = vmatpush.msra.mxu0 0.0
        %1051 = vmatpush.msra.mxu0 0.0
        %1052 = vmatpush.msra.mxu0 0.0
        %1053 = vmatpush.msra.mxu0 0.0
        %1054 = vmatpush.msra.mxu0 0.0
        %1055 = vmatpush.msra.mxu0 %v1026
        %1056 = vmatpush.msra.mxu0 %v1018
        %1057 = vmatpush.msra.mxu0 %v1010
        %1058 = vmatmul.f32.gmra.mxu0 %v1040
        %v1059 = vpop.f32.mrf.mxu0
        %v1060 = vadd.f32 0.0, %v1059
        %1061 = vdwg.mxu0
        %1062 = vmatpush.msra.mxu0 0.0
        %1063 = vmatpush.msra.mxu0 0.0
        %1064 = vmatpush.msra.mxu0 0.0
        %1065 = vmatpush.msra.mxu0 0.0
        %1066 = vmatpush.msra.mxu0 0.0
        %1067 = vmatpush.msra.mxu0 0.0
        %1068 = vmatpush.msra.mxu0 0.0
        %1069 = vmatpush.msra.mxu0 0.0
        %1070 = vmatpush.msra.mxu0 0.0
        %1071 = vmatpush.msra.mxu0 0.0
        %1072 = vmatpush.msra.mxu0 0.0
        %1073 = vmatpush.msra.mxu0 0.0
        %1074 = vmatpush.msra.mxu0 0.0
        %1075 = vmatpush.msra.mxu0 %v1027
        %1076 = vmatpush.msra.mxu0 %v1019
        %1077 = vmatpush.msra.mxu0 %v1011
        %1078 = vmatmul.f32.gmra.mxu0 %v1040
        %v1079 = vpop.f32.mrf.mxu0
        %v1080 = vadd.f32 0.0, %v1079
        %1081 = vdwg.mxu0
        %1082 = vmatpush.msra.mxu0 0.0
        %1083 = vmatpush.msra.mxu0 0.0
        %1084 = vmatpush.msra.mxu0 0.0
        %1085 = vmatpush.msra.mxu0 0.0
        %1086 = vmatpush.msra.mxu0 0.0
        %1087 = vmatpush.msra.mxu0 0.0
        %1088 = vmatpush.msra.mxu0 0.0
        %1089 = vmatpush.msra.mxu0 0.0
        %1090 = vmatpush.msra.mxu0 0.0
        %1091 = vmatpush.msra.mxu0 0.0
        %1092 = vmatpush.msra.mxu0 0.0
        %1093 = vmatpush.msra.mxu0 0.0
        %1094 = vmatpush.msra.mxu0 0.0
        %1095 = vmatpush.msra.mxu0 %v1028
        %1096 = vmatpush.msra.mxu0 %v1020
        %1097 = vmatpush.msra.mxu0 %v1012
        %1098 = vmatmul.f32.gmra.mxu0 %v1040
        %v1099 = vpop.f32.mrf.mxu0
        %v1100 = vadd.f32 0.0, %v1099
        %1101 = vdwg.mxu0
        %1102 = vmatpush.msra.mxu0 0.0
        %1103 = vmatpush.msra.mxu0 0.0
        %1104 = vmatpush.msra.mxu0 0.0
        %1105 = vmatpush.msra.mxu0 0.0
        %1106 = vmatpush.msra.mxu0 0.0
        %1107 = vmatpush.msra.mxu0 0.0
        %1108 = vmatpush.msra.mxu0 0.0
        %1109 = vmatpush.msra.mxu0 0.0
        %1110 = vmatpush.msra.mxu0 0.0
        %1111 = vmatpush.msra.mxu0 0.0
        %1112 = vmatpush.msra.mxu0 0.0
        %1113 = vmatpush.msra.mxu0 0.0
        %1114 = vmatpush.msra.mxu0 0.0
        %1115 = vmatpush.msra.mxu0 %v1029
        %1116 = vmatpush.msra.mxu0 %v1021
        %1117 = vmatpush.msra.mxu0 %v1013
        %1118 = vmatmul.f32.gmra.mxu0 %v1040
        %v1119 = vpop.f32.mrf.mxu0
        %v1120 = vadd.f32 0.0, %v1119
        %1121 = vdwg.mxu0
        %1122 = vmatpush.msra.mxu0 0.0
        %1123 = vmatpush.msra.mxu0 0.0
        %1124 = vmatpush.msra.mxu0 0.0
        %1125 = vmatpush.msra.mxu0 0.0
        %1126 = vmatpush.msra.mxu0 0.0
        %1127 = vmatpush.msra.mxu0 0.0
        %1128 = vmatpush.msra.mxu0 0.0
        %1129 = vmatpush.msra.mxu0 0.0
        %1130 = vmatpush.msra.mxu0 0.0
        %1131 = vmatpush.msra.mxu0 0.0
        %1132 = vmatpush.msra.mxu0 0.0
        %1133 = vmatpush.msra.mxu0 0.0
        %1134 = vmatpush.msra.mxu0 0.0
        %1135 = vmatpush.msra.mxu0 %v1030
        %1136 = vmatpush.msra.mxu0 %v1022
        %1137 = vmatpush.msra.mxu0 %v1014
        %1138 = vmatmul.f32.gmra.mxu0 %v1040
        %v1139 = vpop.f32.mrf.mxu0
        %v1140 = vadd.f32 0.0, %v1139
        %1141 = vdwg.mxu0
        %1142 = vmatpush.msra.mxu0 0.0
        %1143 = vmatpush.msra.mxu0 0.0
        %1144 = vmatpush.msra.mxu0 0.0
        %1145 = vmatpush.msra.mxu0 0.0
        %1146 = vmatpush.msra.mxu0 0.0
        %1147 = vmatpush.msra.mxu0 0.0
        %1148 = vmatpush.msra.mxu0 0.0
        %1149 = vmatpush.msra.mxu0 0.0
        %1150 = vmatpush.msra.mxu0 0.0
        %1151 = vmatpush.msra.mxu0 0.0
        %1152 = vmatpush.msra.mxu0 0.0
        %1153 = vmatpush.msra.mxu0 0.0
        %1154 = vmatpush.msra.mxu0 0.0
        %1155 = vmatpush.msra.mxu0 %v1031
        %1156 = vmatpush.msra.mxu0 %v1023
        %1157 = vmatpush.msra.mxu0 %v1015
        %1158 = vmatmul.f32.gmra.mxu0 %v1040
        %v1159 = vpop.f32.mrf.mxu0
        %v1160 = vadd.f32 0.0, %v1159
        %1161 = vdwg.mxu0
        %1162 = vmatpush.msra.mxu0 0.0
        %1163 = vmatpush.msra.mxu0 0.0
        %1164 = vmatpush.msra.mxu0 0.0
        %1165 = vmatpush.msra.mxu0 0.0
        %1166 = vmatpush.msra.mxu0 0.0
        %1167 = vmatpush.msra.mxu0 0.0
        %1168 = vmatpush.msra.mxu0 0.0
        %1169 = vmatpush.msra.mxu0 0.0
        %1170 = vmatpush.msra.mxu0 0.0
        %1171 = vmatpush.msra.mxu0 0.0
        %1172 = vmatpush.msra.mxu0 0.0
        %1173 = vmatpush.msra.mxu0 0.0
        %1174 = vmatpush.msra.mxu0 0.0
        %1175 = vmatpush.msra.mxu0 %v1032
        %1176 = vmatpush.msra.mxu0 %v1024
        %1177 = vmatpush.msra.mxu0 %v1016
        %1178 = vmatmul.f32.gmra.mxu0 %v1040
        %v1179 = vpop.f32.mrf.mxu0
        %v1180 = vadd.f32 0.0, %v1179
        %1181 = vdwg.mxu0
        %1182 = vmatpush.msra.mxu0 0.0
        %1183 = vmatpush.msra.mxu0 0.0
        %1184 = vmatpush.msra.mxu0 0.0
        %1185 = vmatpush.msra.mxu0 0.0
        %1186 = vmatpush.msra.mxu0 0.0
        %1187 = vmatpush.msra.mxu0 0.0
        %1188 = vmatpush.msra.mxu0 0.0
        %1189 = vmatpush.msra.mxu0 0.0
        %1190 = vmatpush.msra.mxu0 0.0
        %1191 = vmatpush.msra.mxu0 0.0
        %1192 = vmatpush.msra.mxu0 0.0
        %1193 = vmatpush.msra.mxu0 0.0
        %1194 = vmatpush.msra.mxu0 0.0
        %1195 = vmatpush.msra.mxu0 %v1037
        %1196 = vmatpush.msra.mxu0 %v1036
        %1197 = vmatpush.msra.mxu0 %v1035
        %1198 = vmatmul.f32.gmra.mxu0 %v1040
        %v1199 = vpop.f32.mrf.mxu0
        %v1200 = vadd.f32 0.0, %v1199
        %1201 = vdwg.mxu0
        %v1203 = vsel %vm1038, %v1008, 0
        %1205 = vmatpush.msra.mxu0 0.0
        %1206 = vmatpush.msra.mxu0 0.0
        %1207 = vmatpush.msra.mxu0 0.0
        %1208 = vmatpush.msra.mxu0 0.0
        %1209 = vmatpush.msra.mxu0 0.0
        %1210 = vmatpush.msra.mxu0 0.0
        %1211 = vmatpush.msra.mxu0 0.0
        %1212 = vmatpush.msra.mxu0 0.0
        %1213 = vmatpush.msra.mxu0 0.0
        %1214 = vmatpush.msra.mxu0 0.0
        %1215 = vmatpush.msra.mxu0 0.0
        %1216 = vmatpush.msra.mxu0 0.0
        %1217 = vmatpush.msra.mxu0 0.0
        %1218 = vmatpush.msra.mxu0 %v1025
        %1219 = vmatpush.msra.mxu0 %v1017
        %1220 = vmatpush.msra.mxu0 %v1009
        %1221 = vmatmul.f32.gmra.mxu0 %v1203
        %v1222 = vpop.f32.mrf.mxu0
        %v1223 = vadd.f32 %v1060, %v1222
        %1224 = vdwg.mxu0
        %1225 = vmatpush.msra.mxu0 0.0
        %1226 = vmatpush.msra.mxu0 0.0
        %1227 = vmatpush.msra.mxu0 0.0
        %1228 = vmatpush.msra.mxu0 0.0
        %1229 = vmatpush.msra.mxu0 0.0
        %1230 = vmatpush.msra.mxu0 0.0
        %1231 = vmatpush.msra.mxu0 0.0
        %1232 = vmatpush.msra.mxu0 0.0
        %1233 = vmatpush.msra.mxu0 0.0
        %1234 = vmatpush.msra.mxu0 0.0
        %1235 = vmatpush.msra.mxu0 0.0
        %1236 = vmatpush.msra.mxu0 0.0
        %1237 = vmatpush.msra.mxu0 0.0
        %1238 = vmatpush.msra.mxu0 %v1026
        %1239 = vmatpush.msra.mxu0 %v1018
        %1240 = vmatpush.msra.mxu0 %v1010
        %1241 = vmatmul.f32.gmra.mxu0 %v1203
        %v1242 = vpop.f32.mrf.mxu0
        %v1243 = vadd.f32 %v1080, %v1242
        %1244 = vdwg.mxu0
        %1245 = vmatpush.msra.mxu0 0.0
        %1246 = vmatpush.msra.mxu0 0.0
        %1247 = vmatpush.msra.mxu0 0.0
        %1248 = vmatpush.msra.mxu0 0.0
        %1249 = vmatpush.msra.mxu0 0.0
        %1250 = vmatpush.msra.mxu0 0.0
        %1251 = vmatpush.msra.mxu0 0.0
        %1252 = vmatpush.msra.mxu0 0.0
        %1253 = vmatpush.msra.mxu0 0.0
        %1254 = vmatpush.msra.mxu0 0.0
        %1255 = vmatpush.msra.mxu0 0.0
        %1256 = vmatpush.msra.mxu0 0.0
        %1257 = vmatpush.msra.mxu0 0.0
        %1258 = vmatpush.msra.mxu0 %v1027
        %1259 = vmatpush.msra.mxu0 %v1019
        %1260 = vmatpush.msra.mxu0 %v1011
        %1261 = vmatmul.f32.gmra.mxu0 %v1203
        %v1262 = vpop.f32.mrf.mxu0
        %v1263 = vadd.f32 %v1100, %v1262
        %1264 = vdwg.mxu0
        %1265 = vmatpush.msra.mxu0 0.0
        %1266 = vmatpush.msra.mxu0 0.0
        %1267 = vmatpush.msra.mxu0 0.0
        %1268 = vmatpush.msra.mxu0 0.0
        %1269 = vmatpush.msra.mxu0 0.0
        %1270 = vmatpush.msra.mxu0 0.0
        %1271 = vmatpush.msra.mxu0 0.0
        %1272 = vmatpush.msra.mxu0 0.0
        %1273 = vmatpush.msra.mxu0 0.0
        %1274 = vmatpush.msra.mxu0 0.0
        %1275 = vmatpush.msra.mxu0 0.0
        %1276 = vmatpush.msra.mxu0 0.0
        %1277 = vmatpush.msra.mxu0 0.0
        %1278 = vmatpush.msra.mxu0 %v1028
        %1279 = vmatpush.msra.mxu0 %v1020
        %1280 = vmatpush.msra.mxu0 %v1012
        %1281 = vmatmul.f32.gmra.mxu0 %v1203
        %v1282 = vpop.f32.mrf.mxu0
        %v1283 = vadd.f32 %v1120, %v1282
        %1284 = vdwg.mxu0
        %1285 = vmatpush.msra.mxu0 0.0
        %1286 = vmatpush.msra.mxu0 0.0
        %1287 = vmatpush.msra.mxu0 0.0
        %1288 = vmatpush.msra.mxu0 0.0
        %1289 = vmatpush.msra.mxu0 0.0
        %1290 = vmatpush.msra.mxu0 0.0
        %1291 = vmatpush.msra.mxu0 0.0
        %1292 = vmatpush.msra.mxu0 0.0
        %1293 = vmatpush.msra.mxu0 0.0
        %1294 = vmatpush.msra.mxu0 0.0
        %1295 = vmatpush.msra.mxu0 0.0
        %1296 = vmatpush.msra.mxu0 0.0
        %1297 = vmatpush.msra.mxu0 0.0
        %1298 = vmatpush.msra.mxu0 %v1029
        %1299 = vmatpush.msra.mxu0 %v1021
        %1300 = vmatpush.msra.mxu0 %v1013
        %1301 = vmatmul.f32.gmra.mxu0 %v1203
        %v1302 = vpop.f32.mrf.mxu0
        %v1303 = vadd.f32 %v1140, %v1302
        %1304 = vdwg.mxu0
        %1305 = vmatpush.msra.mxu0 0.0
        %1306 = vmatpush.msra.mxu0 0.0
        %1307 = vmatpush.msra.mxu0 0.0
        %1308 = vmatpush.msra.mxu0 0.0
        %1309 = vmatpush.msra.mxu0 0.0
        %1310 = vmatpush.msra.mxu0 0.0
        %1311 = vmatpush.msra.mxu0 0.0
        %1312 = vmatpush.msra.mxu0 0.0
        %1313 = vmatpush.msra.mxu0 0.0
        %1314 = vmatpush.msra.mxu0 0.0
        %1315 = vmatpush.msra.mxu0 0.0
        %1316 = vmatpush.msra.mxu0 0.0
        %1317 = vmatpush.msra.mxu0 0.0
        %1318 = vmatpush.msra.mxu0 %v1030
        %1319 = vmatpush.msra.mxu0 %v1022
        %1320 = vmatpush.msra.mxu0 %v1014
        %1321 = vmatmul.f32.gmra.mxu0 %v1203
        %v1322 = vpop.f32.mrf.mxu0
        %v1323 = vadd.f32 %v1160, %v1322
        %1324 = vdwg.mxu0
        %1325 = vmatpush.msra.mxu0 0.0
        %1326 = vmatpush.msra.mxu0 0.0
        %1327 = vmatpush.msra.mxu0 0.0
        %1328 = vmatpush.msra.mxu0 0.0
        %1329 = vmatpush.msra.mxu0 0.0
        %1330 = vmatpush.msra.mxu0 0.0
        %1331 = vmatpush.msra.mxu0 0.0
        %1332 = vmatpush.msra.mxu0 0.0
        %1333 = vmatpush.msra.mxu0 0.0
        %1334 = vmatpush.msra.mxu0 0.0
        %1335 = vmatpush.msra.mxu0 0.0
        %1336 = vmatpush.msra.mxu0 0.0
        %1337 = vmatpush.msra.mxu0 0.0
        %1338 = vmatpush.msra.mxu0 %v1031
        %1339 = vmatpush.msra.mxu0 %v1023
        %1340 = vmatpush.msra.mxu0 %v1015
        %1341 = vmatmul.f32.gmra.mxu0 %v1203
        %v1342 = vpop.f32.mrf.mxu0
        %v1343 = vadd.f32 %v1180, %v1342
        %1344 = vdwg.mxu0
        %1345 = vmatpush.msra.mxu0 0.0
        %1346 = vmatpush.msra.mxu0 0.0
        %1347 = vmatpush.msra.mxu0 0.0
        %1348 = vmatpush.msra.mxu0 0.0
        %1349 = vmatpush.msra.mxu0 0.0
        %1350 = vmatpush.msra.mxu0 0.0
        %1351 = vmatpush.msra.mxu0 0.0
        %1352 = vmatpush.msra.mxu0 0.0
        %1353 = vmatpush.msra.mxu0 0.0
        %1354 = vmatpush.msra.mxu0 0.0
        %1355 = vmatpush.msra.mxu0 0.0
        %1356 = vmatpush.msra.mxu0 0.0
        %1357 = vmatpush.msra.mxu0 0.0
        %1358 = vmatpush.msra.mxu0 %v1032
        %1359 = vmatpush.msra.mxu0 %v1024
        %1360 = vmatpush.msra.mxu0 %v1016
        %1361 = vmatmul.f32.gmra.mxu0 %v1203
        %v1362 = vpop.f32.mrf.mxu0
        %v1363 = vadd.f32 %v1200, %v1362
        %1364 = vdwg.mxu0
        %s1365 = scalar_lea.vmem %s4, 16
        %v1366 = vld [vmem:[%s1365] sm:$0xff]
        %v1367 = vld [vmem:[#allocation2 + $0x18] sm:$0xff]
        %v1368 = vld [vmem:[#allocation2 + $0x20] sm:$0xff]
        %v1369 = vld [vmem:[#allocation2 + $0x28] sm:$0xff]
        %v1370 = vld [vmem:[#allocation2 + $0x30] sm:$0xff]
        %v1371 = vld [vmem:[#allocation2 + $0x38] sm:$0xff]
        %v1372 = vld [vmem:[#allocation2 + $0x40] sm:$0xff]
        %v1373 = vld [vmem:[#allocation2 + $0x48] sm:$0xff]
        %v1374 = vld [vmem:[#allocation2 + $0x50] sm:$0xff]
        %v1375 = vld [vmem:[#allocation2 + $0x78] sm:$0xff]
        %v1376 = vld [vmem:[#allocation2 + $0x80] sm:$0xff]
        %v1377 = vld [vmem:[#allocation2 + $0x88] sm:$0xff]
        %v1378 = vld [vmem:[#allocation2 + $0x90] sm:$0xff]
        %v1379 = vld [vmem:[#allocation2 + $0x98] sm:$0xff]
        %v1380 = vld [vmem:[#allocation2 + $0xa0] sm:$0xff]
        %v1381 = vld [vmem:[#allocation2 + $0xa8] sm:$0xff]
        %v1382 = vld [vmem:[#allocation2 + $0xb0] sm:$0xff]
        %v1383 = vld [vmem:[#allocation2 + $0xd8] sm:$0xff]
        %v1384 = vld [vmem:[#allocation2 + $0xe0] sm:$0xff]
        %v1385 = vld [vmem:[#allocation2 + $0xe8] sm:$0xff]
        %v1386 = vld [vmem:[#allocation2 + $0xf0] sm:$0xff]
        %v1387 = vld [vmem:[#allocation2 + $0xf8] sm:$0xff]
        %v1388 = vld [vmem:[#allocation2 + $0x100] sm:$0xff]
        %v1389 = vld [vmem:[#allocation2 + $0x108] sm:$0xff]
        %v1390 = vld [vmem:[#allocation2 + $0x110] sm:$0xff]
        %v1392 = vsel %vm1038, %v1366, 0
        %1394 = vmatpush.msra.mxu0 0.0
        %1395 = vmatpush.msra.mxu0 0.0
        %1396 = vmatpush.msra.mxu0 0.0
        %1397 = vmatpush.msra.mxu0 0.0
        %1398 = vmatpush.msra.mxu0 0.0
        %1399 = vmatpush.msra.mxu0 0.0
        %1400 = vmatpush.msra.mxu0 0.0
        %1401 = vmatpush.msra.mxu0 0.0
        %1402 = vmatpush.msra.mxu0 0.0
        %1403 = vmatpush.msra.mxu0 0.0
        %1404 = vmatpush.msra.mxu0 0.0
        %1405 = vmatpush.msra.mxu0 0.0
        %1406 = vmatpush.msra.mxu0 0.0
        %1407 = vmatpush.msra.mxu0 %v1383
        %1408 = vmatpush.msra.mxu0 %v1375
        %1409 = vmatpush.msra.mxu0 %v1367
        %1410 = vmatmul.f32.gmra.mxu0 %v1392
        %v1411 = vpop.f32.mrf.mxu0
        %v1412 = vadd.f32 0.0, %v1411
        %1413 = vdwg.mxu0
        %1414 = vmatpush.msra.mxu0 0.0
        %1415 = vmatpush.msra.mxu0 0.0
        %1416 = vmatpush.msra.mxu0 0.0
        %1417 = vmatpush.msra.mxu0 0.0
        %1418 = vmatpush.msra.mxu0 0.0
        %1419 = vmatpush.msra.mxu0 0.0
        %1420 = vmatpush.msra.mxu0 0.0
        %1421 = vmatpush.msra.mxu0 0.0
        %1422 = vmatpush.msra.mxu0 0.0
        %1423 = vmatpush.msra.mxu0 0.0
        %1424 = vmatpush.msra.mxu0 0.0
        %1425 = vmatpush.msra.mxu0 0.0
        %1426 = vmatpush.msra.mxu0 0.0
        %1427 = vmatpush.msra.mxu0 %v1384
        %1428 = vmatpush.msra.mxu0 %v1376
        %1429 = vmatpush.msra.mxu0 %v1368
        %1430 = vmatmul.f32.gmra.mxu0 %v1392
        %v1431 = vpop.f32.mrf.mxu0
        %v1432 = vadd.f32 0.0, %v1431
        %1433 = vdwg.mxu0
        %1434 = vmatpush.msra.mxu0 0.0
        %1435 = vmatpush.msra.mxu0 0.0
        %1436 = vmatpush.msra.mxu0 0.0
        %1437 = vmatpush.msra.mxu0 0.0
        %1438 = vmatpush.msra.mxu0 0.0
        %1439 = vmatpush.msra.mxu0 0.0
        %1440 = vmatpush.msra.mxu0 0.0
        %1441 = vmatpush.msra.mxu0 0.0
        %1442 = vmatpush.msra.mxu0 0.0
        %1443 = vmatpush.msra.mxu0 0.0
        %1444 = vmatpush.msra.mxu0 0.0
        %1445 = vmatpush.msra.mxu0 0.0
        %1446 = vmatpush.msra.mxu0 0.0
        %1447 = vmatpush.msra.mxu0 %v1385
        %1448 = vmatpush.msra.mxu0 %v1377
        %1449 = vmatpush.msra.mxu0 %v1369
        %1450 = vmatmul.f32.gmra.mxu0 %v1392
        %v1451 = vpop.f32.mrf.mxu0
        %v1452 = vadd.f32 0.0, %v1451
        %1453 = vdwg.mxu0
        %1454 = vmatpush.msra.mxu0 0.0
        %1455 = vmatpush.msra.mxu0 0.0
        %1456 = vmatpush.msra.mxu0 0.0
        %1457 = vmatpush.msra.mxu0 0.0
        %1458 = vmatpush.msra.mxu0 0.0
        %1459 = vmatpush.msra.mxu0 0.0
        %1460 = vmatpush.msra.mxu0 0.0
        %1461 = vmatpush.msra.mxu0 0.0
        %1462 = vmatpush.msra.mxu0 0.0
        %1463 = vmatpush.msra.mxu0 0.0
        %1464 = vmatpush.msra.mxu0 0.0
        %1465 = vmatpush.msra.mxu0 0.0
        %1466 = vmatpush.msra.mxu0 0.0
        %1467 = vmatpush.msra.mxu0 %v1386
        %1468 = vmatpush.msra.mxu0 %v1378
        %1469 = vmatpush.msra.mxu0 %v1370
        %1470 = vmatmul.f32.gmra.mxu0 %v1392
        %v1471 = vpop.f32.mrf.mxu0
        %v1472 = vadd.f32 0.0, %v1471
        %1473 = vdwg.mxu0
        %1474 = vmatpush.msra.mxu0 0.0
        %1475 = vmatpush.msra.mxu0 0.0
        %1476 = vmatpush.msra.mxu0 0.0
        %1477 = vmatpush.msra.mxu0 0.0
        %1478 = vmatpush.msra.mxu0 0.0
        %1479 = vmatpush.msra.mxu0 0.0
        %1480 = vmatpush.msra.mxu0 0.0
        %1481 = vmatpush.msra.mxu0 0.0
        %1482 = vmatpush.msra.mxu0 0.0
        %1483 = vmatpush.msra.mxu0 0.0
        %1484 = vmatpush.msra.mxu0 0.0
        %1485 = vmatpush.msra.mxu0 0.0
        %1486 = vmatpush.msra.mxu0 0.0
        %1487 = vmatpush.msra.mxu0 %v1387
        %1488 = vmatpush.msra.mxu0 %v1379
        %1489 = vmatpush.msra.mxu0 %v1371
        %1490 = vmatmul.f32.gmra.mxu0 %v1392
        %v1491 = vpop.f32.mrf.mxu0
        %v1492 = vadd.f32 0.0, %v1491
        %1493 = vdwg.mxu0
        %1494 = vmatpush.msra.mxu0 0.0
        %1495 = vmatpush.msra.mxu0 0.0
        %1496 = vmatpush.msra.mxu0 0.0
        %1497 = vmatpush.msra.mxu0 0.0
        %1498 = vmatpush.msra.mxu0 0.0
        %1499 = vmatpush.msra.mxu0 0.0
        %1500 = vmatpush.msra.mxu0 0.0
        %1501 = vmatpush.msra.mxu0 0.0
        %1502 = vmatpush.msra.mxu0 0.0
        %1503 = vmatpush.msra.mxu0 0.0
        %1504 = vmatpush.msra.mxu0 0.0
        %1505 = vmatpush.msra.mxu0 0.0
        %1506 = vmatpush.msra.mxu0 0.0
        %1507 = vmatpush.msra.mxu0 %v1388
        %1508 = vmatpush.msra.mxu0 %v1380
        %1509 = vmatpush.msra.mxu0 %v1372
        %1510 = vmatmul.f32.gmra.mxu0 %v1392
        %v1511 = vpop.f32.mrf.mxu0
        %v1512 = vadd.f32 0.0, %v1511
        %1513 = vdwg.mxu0
        %1514 = vmatpush.msra.mxu0 0.0
        %1515 = vmatpush.msra.mxu0 0.0
        %1516 = vmatpush.msra.mxu0 0.0
        %1517 = vmatpush.msra.mxu0 0.0
        %1518 = vmatpush.msra.mxu0 0.0
        %1519 = vmatpush.msra.mxu0 0.0
        %1520 = vmatpush.msra.mxu0 0.0
        %1521 = vmatpush.msra.mxu0 0.0
        %1522 = vmatpush.msra.mxu0 0.0
        %1523 = vmatpush.msra.mxu0 0.0
        %1524 = vmatpush.msra.mxu0 0.0
        %1525 = vmatpush.msra.mxu0 0.0
        %1526 = vmatpush.msra.mxu0 0.0
        %1527 = vmatpush.msra.mxu0 %v1389
        %1528 = vmatpush.msra.mxu0 %v1381
        %1529 = vmatpush.msra.mxu0 %v1373
        %1530 = vmatmul.f32.gmra.mxu0 %v1392
        %v1531 = vpop.f32.mrf.mxu0
        %v1532 = vadd.f32 0.0, %v1531
        %1533 = vdwg.mxu0
        %1534 = vmatpush.msra.mxu0 0.0
        %1535 = vmatpush.msra.mxu0 0.0
        %1536 = vmatpush.msra.mxu0 0.0
        %1537 = vmatpush.msra.mxu0 0.0
        %1538 = vmatpush.msra.mxu0 0.0
        %1539 = vmatpush.msra.mxu0 0.0
        %1540 = vmatpush.msra.mxu0 0.0
        %1541 = vmatpush.msra.mxu0 0.0
        %1542 = vmatpush.msra.mxu0 0.0
        %1543 = vmatpush.msra.mxu0 0.0
        %1544 = vmatpush.msra.mxu0 0.0
        %1545 = vmatpush.msra.mxu0 0.0
        %1546 = vmatpush.msra.mxu0 0.0
        %1547 = vmatpush.msra.mxu0 %v1390
        %1548 = vmatpush.msra.mxu0 %v1382
        %1549 = vmatpush.msra.mxu0 %v1374
        %1550 = vmatmul.f32.gmra.mxu0 %v1392
        %v1551 = vpop.f32.mrf.mxu0
        %v1552 = vadd.f32 0.0, %v1551
        %1553 = vdwg.mxu0
        %v1554 = vadd.f32 %v1223, %v1412
        %v1555 = vadd.f32 %v1243, %v1432
        %v1556 = vadd.f32 %v1263, %v1452
        %v1557 = vadd.f32 %v1283, %v1472
        %v1558 = vadd.f32 %v1303, %v1492
        %v1559 = vadd.f32 %v1323, %v1512
        %v1560 = vadd.f32 %v1343, %v1532
        %v1561 = vadd.f32 %v1363, %v1552
        %1562 = vset.pattern.permute.xlu0 1
        %1563 = vperm.xlu0 %1562, %v465
        %v1564 = vpop.permute.xlu0 %1563
        %v1566 = vadd.f32 %v1554, %v1564
        %v1567 = vadd.f32 %v1555, %v1564
        %v1568 = vadd.f32 %v1556, %v1564
        %v1569 = vadd.f32 %v1557, %v1564
        %v1570 = vadd.f32 %v1558, %v1564
        %v1571 = vadd.f32 %v1559, %v1564
        %v1572 = vadd.f32 %v1560, %v1564
        %v1573 = vadd.f32 %v1561, %v1564
        %v1574 = vmax.f32 %v1566, 0.0
        %v1575 = vmax.f32 %v1567, 0.0
        %v1576 = vmax.f32 %v1568, 0.0
        %v1577 = vmax.f32 %v1569, 0.0
        %v1578 = vmax.f32 %v1570, 0.0
        %v1579 = vmax.f32 %v1571, 0.0
        %v1580 = vmax.f32 %v1572, 0.0
        %v1581 = vmax.f32 %v1573, 0.0
        %v1582 = vld [vmem:[%s5] sm:$0xff]
        %v1583 = vld [vmem:[%s5 + $0x8] sm:$0xff]
        %v1584 = vld [vmem:[%s5 + $0x10] sm:$0xff]
        %v1585 = vld [vmem:[%s5 + $0x18] sm:$0xff]
        %1587 = vset.pattern.permute.xlu0 0
        %1588 = vperm.xlu0 %1587, %v466
        %v1589 = vpop.permute.xlu0 %1588
        %1592 = vset.pattern.permute.xlu0 0
        %1593 = vperm.xlu0 %1592, %v467
        %v1594 = vpop.permute.xlu0 %1593
        %1597 = vset.pattern.permute.xlu0 0
        %1598 = vperm.xlu0 %1597, %v468
        %v1599 = vpop.permute.xlu0 %1598
        %1602 = vset.pattern.permute.xlu0 0
        %1603 = vperm.xlu0 %1602, %v469
        %v1604 = vpop.permute.xlu0 %1603
        %vm1606 = vcmask 64512
        %v1608 = vsel %vm1606, %v1582, 0
        %v1611 = vsel %vm1606, %v1583, 0
        %v1614 = vsel %vm1606, %v1584, 0
        %v1617 = vsel %vm1606, %v1585, 0
        %1619 = vmatpush.msra.mxu0 0.0
        %1620 = vmatpush.msra.mxu0 0.0
        %1621 = vmatpush.msra.mxu0 0.0
        %1622 = vmatpush.msra.mxu0 0.0
        %1623 = vmatpush.msra.mxu0 0.0
        %1624 = vmatpush.msra.mxu0 0.0
        %1625 = vmatpush.msra.mxu0 0.0
        %1626 = vmatpush.msra.mxu0 0.0
        %1627 = vmatpush.msra.mxu0 0.0
        %1628 = vmatpush.msra.mxu0 0.0
        %1629 = vmatpush.msra.mxu0 0.0
        %1630 = vmatpush.msra.mxu0 0.0
        %1631 = vmatpush.msra.mxu0 0.0
        %1632 = vmatpush.msra.mxu0 0.0
        %1633 = vmatpush.msra.mxu0 0.0
        %1634 = vmatpush.msra.mxu0 %v1574
        %1635 = vmatmul.f32.gmra.mxu0 %v1608
        %v1636 = vpop.f32.mrf.mxu0
        %v1637 = vadd.f32 %v1589, %v1636
        %1638 = vmatmul.f32.gmra.mxu0 %v1611
        %v1639 = vpop.f32.mrf.mxu0
        %v1640 = vadd.f32 %v1594, %v1639
        %1641 = vmatmul.f32.gmra.mxu0 %v1614
        %v1642 = vpop.f32.mrf.mxu0
        %v1643 = vadd.f32 %v1599, %v1642
        %1644 = vmatmul.f32.gmra.mxu0 %v1617
        %v1645 = vpop.f32.mrf.mxu0
        %v1646 = vadd.f32 %v1604, %v1645
        %1647 = vdwg.mxu0
        %1648 = vmatpush.msra.mxu0 0.0
        %1649 = vmatpush.msra.mxu0 0.0
        %1650 = vmatpush.msra.mxu0 0.0
        %1651 = vmatpush.msra.mxu0 0.0
        %1652 = vmatpush.msra.mxu0 0.0
        %1653 = vmatpush.msra.mxu0 0.0
        %1654 = vmatpush.msra.mxu0 0.0
        %1655 = vmatpush.msra.mxu0 0.0
        %1656 = vmatpush.msra.mxu0 0.0
        %1657 = vmatpush.msra.mxu0 0.0
        %1658 = vmatpush.msra.mxu0 0.0
        %1659 = vmatpush.msra.mxu0 0.0
        %1660 = vmatpush.msra.mxu0 0.0
        %1661 = vmatpush.msra.mxu0 0.0
        %1662 = vmatpush.msra.mxu0 0.0
        %1663 = vmatpush.msra.mxu0 %v1575
        %1664 = vmatmul.f32.gmra.mxu0 %v1608
        %v1665 = vpop.f32.mrf.mxu0
        %v1666 = vadd.f32 %v1589, %v1665
        %1667 = vmatmul.f32.gmra.mxu0 %v1611
        %v1668 = vpop.f32.mrf.mxu0
        %v1669 = vadd.f32 %v1594, %v1668
        %1670 = vmatmul.f32.gmra.mxu0 %v1614
        %v1671 = vpop.f32.mrf.mxu0
        %v1672 = vadd.f32 %v1599, %v1671
        %1673 = vmatmul.f32.gmra.mxu0 %v1617
        %v1674 = vpop.f32.mrf.mxu0
        %v1675 = vadd.f32 %v1604, %v1674
        %1676 = vdwg.mxu0
        %1677 = vmatpush.msra.mxu0 0.0
        %1678 = vmatpush.msra.mxu0 0.0
        %1679 = vmatpush.msra.mxu0 0.0
        %1680 = vmatpush.msra.mxu0 0.0
        %1681 = vmatpush.msra.mxu0 0.0
        %1682 = vmatpush.msra.mxu0 0.0
        %1683 = vmatpush.msra.mxu0 0.0
        %1684 = vmatpush.msra.mxu0 0.0
        %1685 = vmatpush.msra.mxu0 0.0
        %1686 = vmatpush.msra.mxu0 0.0
        %1687 = vmatpush.msra.mxu0 0.0
        %1688 = vmatpush.msra.mxu0 0.0
        %1689 = vmatpush.msra.mxu0 0.0
        %1690 = vmatpush.msra.mxu0 0.0
        %1691 = vmatpush.msra.mxu0 0.0
        %1692 = vmatpush.msra.mxu0 %v1576
        %1693 = vmatmul.f32.gmra.mxu0 %v1608
        %v1694 = vpop.f32.mrf.mxu0
        %v1695 = vadd.f32 %v1589, %v1694
        %1696 = vmatmul.f32.gmra.mxu0 %v1611
        %v1697 = vpop.f32.mrf.mxu0
        %v1698 = vadd.f32 %v1594, %v1697
        %1699 = vmatmul.f32.gmra.mxu0 %v1614
        %v1700 = vpop.f32.mrf.mxu0
        %v1701 = vadd.f32 %v1599, %v1700
        %1702 = vmatmul.f32.gmra.mxu0 %v1617
        %v1703 = vpop.f32.mrf.mxu0
        %v1704 = vadd.f32 %v1604, %v1703
        %1705 = vdwg.mxu0
        %1706 = vmatpush.msra.mxu0 0.0
        %1707 = vmatpush.msra.mxu0 0.0
        %1708 = vmatpush.msra.mxu0 0.0
        %1709 = vmatpush.msra.mxu0 0.0
        %1710 = vmatpush.msra.mxu0 0.0
        %1711 = vmatpush.msra.mxu0 0.0
        %1712 = vmatpush.msra.mxu0 0.0
        %1713 = vmatpush.msra.mxu0 0.0
        %1714 = vmatpush.msra.mxu0 0.0
        %1715 = vmatpush.msra.mxu0 0.0
        %1716 = vmatpush.msra.mxu0 0.0
        %1717 = vmatpush.msra.mxu0 0.0
        %1718 = vmatpush.msra.mxu0 0.0
        %1719 = vmatpush.msra.mxu0 0.0
        %1720 = vmatpush.msra.mxu0 0.0
        %1721 = vmatpush.msra.mxu0 %v1577
        %1722 = vmatmul.f32.gmra.mxu0 %v1608
        %v1723 = vpop.f32.mrf.mxu0
        %v1724 = vadd.f32 %v1589, %v1723
        %1725 = vmatmul.f32.gmra.mxu0 %v1611
        %v1726 = vpop.f32.mrf.mxu0
        %v1727 = vadd.f32 %v1594, %v1726
        %1728 = vmatmul.f32.gmra.mxu0 %v1614
        %v1729 = vpop.f32.mrf.mxu0
        %v1730 = vadd.f32 %v1599, %v1729
        %1731 = vmatmul.f32.gmra.mxu0 %v1617
        %v1732 = vpop.f32.mrf.mxu0
        %v1733 = vadd.f32 %v1604, %v1732
        %1734 = vdwg.mxu0
        %1735 = vmatpush.msra.mxu0 0.0
        %1736 = vmatpush.msra.mxu0 0.0
        %1737 = vmatpush.msra.mxu0 0.0
        %1738 = vmatpush.msra.mxu0 0.0
        %1739 = vmatpush.msra.mxu0 0.0
        %1740 = vmatpush.msra.mxu0 0.0
        %1741 = vmatpush.msra.mxu0 0.0
        %1742 = vmatpush.msra.mxu0 0.0
        %1743 = vmatpush.msra.mxu0 0.0
        %1744 = vmatpush.msra.mxu0 0.0
        %1745 = vmatpush.msra.mxu0 0.0
        %1746 = vmatpush.msra.mxu0 0.0
        %1747 = vmatpush.msra.mxu0 0.0
        %1748 = vmatpush.msra.mxu0 0.0
        %1749 = vmatpush.msra.mxu0 0.0
        %1750 = vmatpush.msra.mxu0 %v1578
        %1751 = vmatmul.f32.gmra.mxu0 %v1608
        %v1752 = vpop.f32.mrf.mxu0
        %v1753 = vadd.f32 %v1589, %v1752
        %1754 = vmatmul.f32.gmra.mxu0 %v1611
        %v1755 = vpop.f32.mrf.mxu0
        %v1756 = vadd.f32 %v1594, %v1755
        %1757 = vmatmul.f32.gmra.mxu0 %v1614
        %v1758 = vpop.f32.mrf.mxu0
        %v1759 = vadd.f32 %v1599, %v1758
        %1760 = vmatmul.f32.gmra.mxu0 %v1617
        %v1761 = vpop.f32.mrf.mxu0
        %v1762 = vadd.f32 %v1604, %v1761
        %1763 = vdwg.mxu0
        %1764 = vmatpush.msra.mxu0 0.0
        %1765 = vmatpush.msra.mxu0 0.0
        %1766 = vmatpush.msra.mxu0 0.0
        %1767 = vmatpush.msra.mxu0 0.0
        %1768 = vmatpush.msra.mxu0 0.0
        %1769 = vmatpush.msra.mxu0 0.0
        %1770 = vmatpush.msra.mxu0 0.0
        %1771 = vmatpush.msra.mxu0 0.0
        %1772 = vmatpush.msra.mxu0 0.0
        %1773 = vmatpush.msra.mxu0 0.0
        %1774 = vmatpush.msra.mxu0 0.0
        %1775 = vmatpush.msra.mxu0 0.0
        %1776 = vmatpush.msra.mxu0 0.0
        %1777 = vmatpush.msra.mxu0 0.0
        %1778 = vmatpush.msra.mxu0 0.0
        %1779 = vmatpush.msra.mxu0 %v1579
        %1780 = vmatmul.f32.gmra.mxu0 %v1608
        %v1781 = vpop.f32.mrf.mxu0
        %v1782 = vadd.f32 %v1589, %v1781
        %1783 = vmatmul.f32.gmra.mxu0 %v1611
        %v1784 = vpop.f32.mrf.mxu0
        %v1785 = vadd.f32 %v1594, %v1784
        %1786 = vmatmul.f32.gmra.mxu0 %v1614
        %v1787 = vpop.f32.mrf.mxu0
        %v1788 = vadd.f32 %v1599, %v1787
        %1789 = vmatmul.f32.gmra.mxu0 %v1617
        %v1790 = vpop.f32.mrf.mxu0
        %v1791 = vadd.f32 %v1604, %v1790
        %1792 = vdwg.mxu0
        %1793 = vmatpush.msra.mxu0 0.0
        %1794 = vmatpush.msra.mxu0 0.0
        %1795 = vmatpush.msra.mxu0 0.0
        %1796 = vmatpush.msra.mxu0 0.0
        %1797 = vmatpush.msra.mxu0 0.0
        %1798 = vmatpush.msra.mxu0 0.0
        %1799 = vmatpush.msra.mxu0 0.0
        %1800 = vmatpush.msra.mxu0 0.0
        %1801 = vmatpush.msra.mxu0 0.0
        %1802 = vmatpush.msra.mxu0 0.0
        %1803 = vmatpush.msra.mxu0 0.0
        %1804 = vmatpush.msra.mxu0 0.0
        %1805 = vmatpush.msra.mxu0 0.0
        %1806 = vmatpush.msra.mxu0 0.0
        %1807 = vmatpush.msra.mxu0 0.0
        %1808 = vmatpush.msra.mxu0 %v1580
        %1809 = vmatmul.f32.gmra.mxu0 %v1608
        %v1810 = vpop.f32.mrf.mxu0
        %v1811 = vadd.f32 %v1589, %v1810
        %1812 = vmatmul.f32.gmra.mxu0 %v1611
        %v1813 = vpop.f32.mrf.mxu0
        %v1814 = vadd.f32 %v1594, %v1813
        %1815 = vmatmul.f32.gmra.mxu0 %v1614
        %v1816 = vpop.f32.mrf.mxu0
        %v1817 = vadd.f32 %v1599, %v1816
        %1818 = vmatmul.f32.gmra.mxu0 %v1617
        %v1819 = vpop.f32.mrf.mxu0
        %v1820 = vadd.f32 %v1604, %v1819
        %1821 = vdwg.mxu0
        %1822 = vmatpush.msra.mxu0 0.0
        %1823 = vmatpush.msra.mxu0 0.0
        %1824 = vmatpush.msra.mxu0 0.0
        %1825 = vmatpush.msra.mxu0 0.0
        %1826 = vmatpush.msra.mxu0 0.0
        %1827 = vmatpush.msra.mxu0 0.0
        %1828 = vmatpush.msra.mxu0 0.0
        %1829 = vmatpush.msra.mxu0 0.0
        %1830 = vmatpush.msra.mxu0 0.0
        %1831 = vmatpush.msra.mxu0 0.0
        %1832 = vmatpush.msra.mxu0 0.0
        %1833 = vmatpush.msra.mxu0 0.0
        %1834 = vmatpush.msra.mxu0 0.0
        %1835 = vmatpush.msra.mxu0 0.0
        %1836 = vmatpush.msra.mxu0 0.0
        %1837 = vmatpush.msra.mxu0 %v1581
        %1838 = vmatmul.f32.gmra.mxu0 %v1608
        %v1839 = vpop.f32.mrf.mxu0
        %v1840 = vadd.f32 %v1589, %v1839
        %1841 = vmatmul.f32.gmra.mxu0 %v1611
        %v1842 = vpop.f32.mrf.mxu0
        %v1843 = vadd.f32 %v1594, %v1842
        %1844 = vmatmul.f32.gmra.mxu0 %v1614
        %v1845 = vpop.f32.mrf.mxu0
        %v1846 = vadd.f32 %v1599, %v1845
        %1847 = vmatmul.f32.gmra.mxu0 %v1617
        %v1848 = vpop.f32.mrf.mxu0
        %v1849 = vadd.f32 %v1604, %v1848
        %1850 = vdwg.mxu0
        %v1851 = vmax.f32 %v1637, 0.0
        %v1852 = vmax.f32 %v1666, 0.0
        %v1853 = vmax.f32 %v1695, 0.0
        %v1854 = vmax.f32 %v1724, 0.0
        %v1855 = vmax.f32 %v1753, 0.0
        %v1856 = vmax.f32 %v1782, 0.0
        %v1857 = vmax.f32 %v1811, 0.0
        %v1858 = vmax.f32 %v1840, 0.0
        %v1859 = vmax.f32 %v1640, 0.0
        %v1860 = vmax.f32 %v1669, 0.0
        %v1861 = vmax.f32 %v1698, 0.0
        %v1862 = vmax.f32 %v1727, 0.0
        %v1863 = vmax.f32 %v1756, 0.0
        %v1864 = vmax.f32 %v1785, 0.0
        %v1865 = vmax.f32 %v1814, 0.0
        %v1866 = vmax.f32 %v1843, 0.0
        %v1867 = vmax.f32 %v1643, 0.0
        %v1868 = vmax.f32 %v1672, 0.0
        %v1869 = vmax.f32 %v1701, 0.0
        %v1870 = vmax.f32 %v1730, 0.0
        %v1871 = vmax.f32 %v1759, 0.0
        %v1872 = vmax.f32 %v1788, 0.0
        %v1873 = vmax.f32 %v1817, 0.0
        %v1874 = vmax.f32 %v1846, 0.0
        %v1875 = vmax.f32 %v1646, 0.0
        %v1876 = vmax.f32 %v1675, 0.0
        %v1877 = vmax.f32 %v1704, 0.0
        %v1878 = vmax.f32 %v1733, 0.0
        %v1879 = vmax.f32 %v1762, 0.0
        %v1880 = vmax.f32 %v1791, 0.0
        %v1881 = vmax.f32 %v1820, 0.0
        %v1882 = vmax.f32 %v1849, 0.0
        %v1883 = vadd.f32 %v470, %v1851
        %v1884 = vadd.f32 %v471, %v1852
        %v1885 = vadd.f32 %v472, %v1853
        %v1886 = vadd.f32 %v473, %v1854
        %v1887 = vadd.f32 %v474, %v1855
        %v1888 = vadd.f32 %v475, %v1856
        %v1889 = vadd.f32 %v476, %v1857
        %v1890 = vadd.f32 %v477, %v1858
        %v1891 = vadd.f32 %v478, %v1859
        %v1892 = vadd.f32 %v479, %v1860
        %v1893 = vadd.f32 %v480, %v1861
        %v1894 = vadd.f32 %v481, %v1862
        %v1895 = vadd.f32 %v482, %v1863
        %v1896 = vadd.f32 %v483, %v1864
        %v1897 = vadd.f32 %v484, %v1865
        %v1898 = vadd.f32 %v485, %v1866
        %v1899 = vadd.f32 %v486, %v1867
        %v1900 = vadd.f32 %v487, %v1868
        %v1901 = vadd.f32 %v488, %v1869
        %v1902 = vadd.f32 %v489, %v1870
        %v1903 = vadd.f32 %v490, %v1871
        %v1904 = vadd.f32 %v491, %v1872
        %v1905 = vadd.f32 %v492, %v1873
        %v1906 = vadd.f32 %v493, %v1874
        %v1907 = vadd.f32 %v494, %v1875
        %v1908 = vadd.f32 %v495, %v1876
        %v1909 = vadd.f32 %v496, %v1877
        %v1910 = vadd.f32 %v497, %v1878
        %v1911 = vadd.f32 %v498, %v1879
        %v1912 = vadd.f32 %v499, %v1880
        %v1913 = vadd.f32 %v500, %v1881
        %v1914 = vadd.f32 %v501, %v1882
        %v1915 = vmax.f32 %v1883, 0.0
        %v1916 = vmax.f32 %v1884, 0.0
        %v1917 = vmax.f32 %v1885, 0.0
        %v1918 = vmax.f32 %v1886, 0.0
        %v1919 = vmax.f32 %v1887, 0.0
        %v1920 = vmax.f32 %v1888, 0.0
        %v1921 = vmax.f32 %v1889, 0.0
        %v1922 = vmax.f32 %v1890, 0.0
        %v1923 = vmax.f32 %v1891, 0.0
        %v1924 = vmax.f32 %v1892, 0.0
        %v1925 = vmax.f32 %v1893, 0.0
        %v1926 = vmax.f32 %v1894, 0.0
        %v1927 = vmax.f32 %v1895, 0.0
        %v1928 = vmax.f32 %v1896, 0.0
        %v1929 = vmax.f32 %v1897, 0.0
        %v1930 = vmax.f32 %v1898, 0.0
        %v1931 = vmax.f32 %v1899, 0.0
        %v1932 = vmax.f32 %v1900, 0.0
        %v1933 = vmax.f32 %v1901, 0.0
        %v1934 = vmax.f32 %v1902, 0.0
        %v1935 = vmax.f32 %v1903, 0.0
        %v1936 = vmax.f32 %v1904, 0.0
        %v1937 = vmax.f32 %v1905, 0.0
        %v1938 = vmax.f32 %v1906, 0.0
        %v1939 = vmax.f32 %v1907, 0.0
        %v1940 = vmax.f32 %v1908, 0.0
        %v1941 = vmax.f32 %v1909, 0.0
        %v1942 = vmax.f32 %v1910, 0.0
        %v1943 = vmax.f32 %v1911, 0.0
        %v1944 = vmax.f32 %v1912, 0.0
        %v1945 = vmax.f32 %v1913, 0.0
        %v1946 = vmax.f32 %v1914, 0.0
        %1947 = vst [vmem:[%s454] sm:$0xff] %v1915
        %1948 = vst [vmem:[%s454 + $0x8] sm:$0xff] %v1916
        %1949 = vst [vmem:[%s454 + $0x10] sm:$0xff] %v1917
        %1950 = vst [vmem:[%s454 + $0x18] sm:$0xff] %v1918
        %1951 = vst [vmem:[%s454 + $0x20] sm:$0xff] %v1919
        %1952 = vst [vmem:[%s454 + $0x28] sm:$0xff] %v1920
        %1953 = vst [vmem:[%s454 + $0x30] sm:$0xff] %v1921
        %1954 = vst [vmem:[%s454 + $0x38] sm:$0xff] %v1922
        %1955 = vst [vmem:[%s454 + $0x40] sm:$0xff] %v1923
        %1956 = vst [vmem:[%s454 + $0x48] sm:$0xff] %v1924
        %1957 = vst [vmem:[%s454 + $0x50] sm:$0xff] %v1925
        %1958 = vst [vmem:[%s454 + $0x58] sm:$0xff] %v1926
        %1959 = vst [vmem:[%s454 + $0x60] sm:$0xff] %v1927
        %1960 = vst [vmem:[%s454 + $0x68] sm:$0xff] %v1928
        %1961 = vst [vmem:[%s454 + $0x70] sm:$0xff] %v1929
        %1962 = vst [vmem:[%s454 + $0x78] sm:$0xff] %v1930
        %1963 = vst [vmem:[%s454 + $0x80] sm:$0xff] %v1931
        %1964 = vst [vmem:[%s454 + $0x88] sm:$0xff] %v1932
        %1965 = vst [vmem:[%s454 + $0x90] sm:$0xff] %v1933
        %1966 = vst [vmem:[%s454 + $0x98] sm:$0xff] %v1934
        %1967 = vst [vmem:[%s454 + $0xa0] sm:$0xff] %v1935
        %1968 = vst [vmem:[%s454 + $0xa8] sm:$0xff] %v1936
        %1969 = vst [vmem:[%s454 + $0xb0] sm:$0xff] %v1937
        %1970 = vst [vmem:[%s454 + $0xb8] sm:$0xff] %v1938
        %1971 = vst [vmem:[%s454 + $0xc0] sm:$0xff] %v1939
        %1972 = vst [vmem:[%s454 + $0xc8] sm:$0xff] %v1940
        %1973 = vst [vmem:[%s454 + $0xd0] sm:$0xff] %v1941
        %1974 = vst [vmem:[%s454 + $0xd8] sm:$0xff] %v1942
        %1975 = vst [vmem:[%s454 + $0xe0] sm:$0xff] %v1943
        %1976 = vst [vmem:[%s454 + $0xe8] sm:$0xff] %v1944
        %1977 = vst [vmem:[%s454 + $0xf0] sm:$0xff] %v1945
        %1978 = vst [vmem:[%s454 + $0xf8] sm:$0xff] %v1946
        %s1979 = sand.u32 %s255, 1
        %s1980 = scalar_lea.sflag [#allocation5], %s1979
        %s1981 = sand.u32 %s255, 1
        %s1982 = smul.addr %s1981, 256
        %s1983 = scalar_lea.vmem [#allocation9], %s1982
        // Predicated region
        $region65: #{tpu_custom_call.1} parent=51 // pred_check
          %p1984 = pneg %p265
        $region66: #{tpu_custom_call.1} parent=51 // pred_check_branch
          %1986 = sbr.rel (%p1984) target = $region68
        $region67: #{tpu_custom_call.1} parent=51 // pred_region
          %s1987 = smul.u32 8, %s33
          %1989 = vsyncadd %s1980, 0
          %s1990 = smul.addr %s32, 64
          %s1991 = sadd.s32 %s1987, %s1990
          %s1992 = smul.addr %s1991, 8
          %s1993 = scalar_lea.hbm %s8, %s1992
          %s1994 = sshll.u32 %s1983, 4
          %s1995 = int_to_ptr.vmem [resolvable:$true] %s1994
          %s1996 = sshll.u32 %s1993, 4
          %s1997 = int_to_ptr.hbm [resolvable:$true] %s1996
          %2002 = dma.vmem_to_hbm [thread:$0]  %s1995, 4096, %s1997, %s1980, 1024, 2048, 64
        $region68: #{tpu_custom_call.1} parent=51 // pred_fallthru
          _
      $region52: #{tpu_custom_call.1} parent=5 // pred_fallthru
        _
      %p2003 = scmp.le.s32.totalorder 2, %s23
      // Predicated region
      $region69: #{tpu_custom_call.1} parent=5 // pred_check
        %p2004 = pneg %p2003
      $region70: #{tpu_custom_call.1} parent=5 // pred_check_branch
        %2006 = sbr.rel (%p2004) target = $region72
      $region71: #{tpu_custom_call.1} parent=5 // pred_region
        %s2007 = ssub.s32 %s23, 2
        // Predicated region
        $region73: #{tpu_custom_call.1} parent=71 // pred_check
          %p2008 = pneg %p271
        $region74: #{tpu_custom_call.1} parent=71 // pred_check_branch
          %2010 = sbr.rel (%p2008) target = $region76
        $region75: #{tpu_custom_call.1} parent=71 // pred_region
          %s2011 = sand.u32 %s256, 1
          %s2012 = scalar_lea.sflag [#allocation5], %s2011
          %s2013 = sand.u32 %s256, 1
          %s2014 = smul.addr %s2013, 256
          %s2015 = scalar_lea.vmem [#allocation9], %s2014
          %2017 = dma.done %s2012, 4096
        $region76: #{tpu_custom_call.1} parent=71 // pred_fallthru
          _
      $region72: #{tpu_custom_call.1} parent=5 // pred_fallthru
        _
    $region6: #{tpu_custom_call.1} parent=1 // loop_footer
      %s27 = sadd.s32 1, %s23
    $region7: #{tpu_custom_call.1} parent=1 // loop_footer_branch
      %22 = sbr.rel target = $region3
    $region8: #{tpu_custom_call.1} parent=1 // loop_exit
      _
    %2018 = vsyncpa [#allocation4], 1
    %s2019 = scalar_lea.sflag [#allocation4], 1
    %2020 = vsyncpa %s2019, 1
    %2021 = vsyncpa [#allocation7], 1
    %s2022 = scalar_lea.sflag [#allocation7], 1
    %2023 = vsyncpa %s2022, 1
    %2024 = vsyncpa [#allocation5], 1
    %s2025 = scalar_lea.sflag [#allocation5], 1
    %2026 = vsyncpa %s2025, 1

</llo_original>
